<compile_context>
chip_gen: v6e
topology: v6e:2x2x1
jax: 0.10.0
libtpu: 0.0.40
codegen_flags: <defaults>
</compile_context>

<pallas_src>
import jax
import jax.numpy as jnp
from jax.experimental import pallas as pl
from jax.experimental.pallas import tpu as pltpu


def _elu(x):
    # ELU(alpha=1.0), matching F.elu; exp argument clamped to <= 0 so the
    # unselected jnp.where branch can never overflow to inf.
    return jnp.where(x > 0, x, jnp.exp(jnp.minimum(x, 0.0)) - 1.0)


def _round_up(x, m):
    return (x + m - 1) // m * m


def _cdiv(a, b):
    return -(-a // b)


def value_model_kernel(s_ref, rh_ref,
                       w1_ref, b1_ref,
                       w2_ref, b2_ref,
                       w3_ref, b3_ref,
                       w4_ref, b4_ref,
                       out_ref, x_ref):
    sd = s_ref.shape[1]

    # Stage [state | rnn_hidden] into one (TB, d_in) f32 scratch tile so that
    # layer 1 is a single K=d_in MXU push instead of two small-K matmuls.
    x_ref[:, :sd] = s_ref[...].astype(jnp.float32)
    x_ref[:, sd:] = rh_ref[...].astype(jnp.float32)

    # Layer 1: bf16 MXU operands, f32 accumulation (the cast rides the VPU).
    z = jnp.dot(x_ref[...].astype(jnp.bfloat16), w1_ref[...],
                preferred_element_type=jnp.float32)
    a = _elu(z + b1_ref[...]).astype(jnp.bfloat16)

    # Layer 2.
    z = jnp.dot(a, w2_ref[...], preferred_element_type=jnp.float32)
    a = _elu(z + b2_ref[...]).astype(jnp.bfloat16)

    # Layer 3 (kept in f32 for the tail).
    z = jnp.dot(a, w3_ref[...], preferred_element_type=jnp.float32)
    a = _elu(z + b3_ref[...])                                   # (TB, hid) f32

    # Layer 4 (hidden -> 1), produced directly as a lane-dense (1, TB) row:
    # one (1, hid) @ (hid, TB) MXU matmul; the (TB, hid) -> (hid, TB)
    # transpose goes through the XLU, which is otherwise idle here.
    v = jnp.dot(w4_ref[...], a.T, preferred_element_type=jnp.float32)
    out_ref[...] = v + b4_ref[0, 0]                             # scalar bias (SMEM)


def _choose_batch_tile(B, block_batch):
    """Batch-tile size TB.

    Multiples of 128 keep the (1, TB) output stores unmasked; >= 2 tiles let
    the "parallel" grid axis feed both of v7x's TensorCores; the edge tile is
    a partial block handled by Pallas, so there is no host-side padding pass.
    Falls back to a single exact tile when padded-row compute would dominate
    (matters on single-TC v5e/v6e).
    """
    if B <= 128:
        return B
    n = max(2, _cdiv(B, block_batch))
    tb = min(block_batch, _round_up(_cdiv(B, n), 128))
    if n * tb - B > B // 4:          # too much wasted compute on padded rows
        return min(B, block_batch)
    return tb


def value_model_forward(state, rnn_hidden, params, *, block_batch=1024):
    """state: (B, state_dim), rnn_hidden: (B, rnn_hidden_dim) -> (B, 1) f32."""
    (w1, b1), (w2, b2), (w3, b3), (w4, b4) = params
    B, state_dim = state.shape
    rnn_dim = rnn_hidden.shape[1]
    d_in = state_dim + rnn_dim
    hid = w1.shape[1]

    TB = _choose_batch_tile(B, block_batch)
    n_tiles = _cdiv(B, TB)

    # Weights are tiny: per-call casts are negligible (and cached under jit).
    # MXU operands in bf16 (f32 accumulation in-kernel); tail math in f32.
    w1b = w1.astype(jnp.bfloat16)
    w2b = w2.astype(jnp.bfloat16)
    w3b = w3.astype(jnp.bfloat16)
    w4row = w4.reshape(1, hid).astype(jnp.float32)
    b1f = b1.reshape(1, hid).astype(jnp.float32)
    b2f = b2.reshape(1, hid).astype(jnp.float32)
    b3f = b3.reshape(1, hid).astype(jnp.float32)
    b4s = b4.reshape(1, 1).astype(jnp.float32)

    def resident(shape):
        # Constant index_map -> fetched once, stays resident in VMEM.
        return pl.BlockSpec(shape, lambda i: (0,) * len(shape))

    out = pl.pallas_call(
        value_model_kernel,
        out_shape=jax.ShapeDtypeStruct((1, B), jnp.float32),
        grid=(n_tiles,),
        in_specs=[
            pl.BlockSpec((TB, state_dim), lambda i: (i, 0)),
            pl.BlockSpec((TB, rnn_dim), lambda i: (i, 0)),
            resident((d_in, hid)),
            resident((1, hid)),
            resident((hid, hid)),
            resident((1, hid)),
            resident((hid, hid)),
            resident((1, hid)),
            resident((1, hid)),
            pl.BlockSpec(memory_space=pltpu.MemorySpace.SMEM),
        ],
        out_specs=pl.BlockSpec((1, TB), lambda i: (0, i)),
        scratch_shapes=[pltpu.VMEM((TB, d_in), jnp.float32)],
        compiler_params=pltpu.CompilerParams(
            dimension_semantics=("parallel",)),
    )(state, rnn_hidden, w1b, b1f, w2b, b2f, w3b, b3f, w4row, b4s)

    return out.reshape(B, 1)


def init_params(key, state_dim, rnn_hidden_dim, hidden_dim):
    """nn.Linear-style init (uniform +-1/sqrt(fan_in)); weights stored as
    (in_features, out_features) so the math is x @ W + b."""
    d_in = state_dim + rnn_hidden_dim
    dims = [(d_in, hidden_dim), (hidden_dim, hidden_dim),
            (hidden_dim, hidden_dim), (hidden_dim, 1)]
    params = []
    for fan_in, fan_out in dims:
        key, kw, kb = jax.random.split(key, 3)
        bound = 1.0 / jnp.sqrt(fan_in)
        w = jax.random.uniform(kw, (fan_in, fan_out), jnp.float32, -bound, bound)
        b = jax.random.uniform(kb, (1, fan_out), jnp.float32, -bound, bound)
        params.append((w, b))
    return params


def reference_forward(state, rnn_hidden, params):
    x = jnp.concatenate([state, rnn_hidden], axis=1).astype(jnp.float32)
    (w1, b1), (w2, b2), (w3, b3), (w4, b4) = params
    h = jax.nn.elu(x @ w1 + b1)
    h = jax.nn.elu(h @ w2 + b2)
    h = jax.nn.elu(h @ w3 + b3)
    return h @ w4 + b4


if __name__ == "__main__":
    # Small shapes consistent with the module; batch=256 exercises two batch
    # tiles (resident weights across grid steps, lane-dense (1, 128) output
    # rows, and the "parallel" grid axis) while keeping every shape aligned.
    batch, state_dim, rnn_hidden_dim, hidden_dim = 256, 16, 48, 128

    key = jax.random.PRNGKey(0)
    k_s, k_h, k_p = jax.random.split(key, 3)
    state = jax.random.normal(k_s, (batch, state_dim), jnp.float32)
    rnn_hidden = jax.random.normal(k_h, (batch, rnn_hidden_dim), jnp.float32)
    params = init_params(k_p, state_dim, rnn_hidden_dim, hidden_dim)

    out = jax.block_until_ready(value_model_forward(state, rnn_hidden, params))
    ref = reference_forward(state, rnn_hidden, params)

    assert out.shape == (batch, 1)
    # bf16 MXU operands with f32 accumulation vs. the pure-f32 reference.
    assert jnp.allclose(out, ref, atol=2e-2, rtol=2e-2), (
        float(jnp.max(jnp.abs(out - ref))))

    print("KERNEL_OK")
</pallas_src>

<mosaic_0001>
module attributes {stable_mosaic.version = 11 : i64} {
  func.func @value_model_kernel(%arg0: i32, %arg1: memref<128x16xf32, #tpu.memory_space<vmem>>, %arg2: memref<128x48xf32, #tpu.memory_space<vmem>>, %arg3: memref<64x128xbf16, #tpu.memory_space<vmem>>, %arg4: memref<1x128xf32, #tpu.memory_space<vmem>>, %arg5: memref<128x128xbf16, #tpu.memory_space<vmem>>, %arg6: memref<1x128xf32, #tpu.memory_space<vmem>>, %arg7: memref<128x128xbf16, #tpu.memory_space<vmem>>, %arg8: memref<1x128xf32, #tpu.memory_space<vmem>>, %arg9: memref<1x128xf32, #tpu.memory_space<vmem>>, %arg10: memref<1x1xf32, #tpu.memory_space<smem>>, %arg11: memref<1x128xf32, #tpu.memory_space<vmem>>, %arg12: memref<128x64xf32, #tpu.memory_space<vmem>>) attributes {dimension_semantics = [#tpu.dimension_semantics<parallel>], iteration_bounds = array<i64: 2>, scalar_prefetch = 0 : i64, scratch_operands = 1 : i64, tpu.core_type = #tpu.core_type<tc>, window_params = [{transform_indices = @transform_0, window_bounds = array<i64: 128, 16>}, {transform_indices = @transform_1, window_bounds = array<i64: 128, 48>}, {pipeline_mode = #tpu.pipeline_mode<synchronous>, transform_indices = @transform_2, window_bounds = array<i64: 64, 128>}, {pipeline_mode = #tpu.pipeline_mode<synchronous>, transform_indices = @transform_3, window_bounds = array<i64: 1, 128>}, {pipeline_mode = #tpu.pipeline_mode<synchronous>, transform_indices = @transform_4, window_bounds = array<i64: 128, 128>}, {pipeline_mode = #tpu.pipeline_mode<synchronous>, transform_indices = @transform_5, window_bounds = array<i64: 1, 128>}, {pipeline_mode = #tpu.pipeline_mode<synchronous>, transform_indices = @transform_6, window_bounds = array<i64: 128, 128>}, {pipeline_mode = #tpu.pipeline_mode<synchronous>, transform_indices = @transform_7, window_bounds = array<i64: 1, 128>}, {pipeline_mode = #tpu.pipeline_mode<synchronous>, transform_indices = @transform_8, window_bounds = array<i64: 1, 128>}, {transform_indices = @transform_9, window_bounds = array<i64: 1, 1>}, {transform_indices = @transform_10, window_bounds = array<i64: 1, 128>}]} {
    %c0 = arith.constant 0 : index
    %c0_0 = arith.constant 0 : index
    %0 = vector.load %arg1[%c0, %c0_0] : memref<128x16xf32, #tpu.memory_space<vmem>>, vector<128x16xf32>
    %c0_1 = arith.constant 0 : index
    %c0_2 = arith.constant 0 : index
    %1 = vector.load %arg12[%c0_1, %c0_2] : memref<128x64xf32, #tpu.memory_space<vmem>>, vector<128x16xf32>
    tpu.vector_store %arg12[%c0_1, %c0_2], %0 {strides = array<i32>} : memref<128x64xf32, #tpu.memory_space<vmem>>, vector<128x16xf32>,
    %c0_3 = arith.constant 0 : index
    %c0_4 = arith.constant 0 : index
    %2 = vector.load %arg2[%c0_3, %c0_4] : memref<128x48xf32, #tpu.memory_space<vmem>>, vector<128x48xf32>
    %c0_5 = arith.constant 0 : index
    %c16 = arith.constant 16 : index
    %3 = vector.load %arg12[%c0_5, %c16] : memref<128x64xf32, #tpu.memory_space<vmem>>, vector<128x48xf32>
    tpu.vector_store %arg12[%c0_5, %c16], %2 {strides = array<i32>} : memref<128x64xf32, #tpu.memory_space<vmem>>, vector<128x48xf32>,
    %c0_6 = arith.constant 0 : index
    %c0_7 = arith.constant 0 : index
    %4 = vector.load %arg12[%c0_6, %c0_7] : memref<128x64xf32, #tpu.memory_space<vmem>>, vector<128x64xf32>
    %5 = arith.truncf %4 : vector<128x64xf32> to vector<128x64xbf16>
    %c0_8 = arith.constant 0 : index
    %c0_9 = arith.constant 0 : index
    %6 = vector.load %arg3[%c0_8, %c0_9] : memref<64x128xbf16, #tpu.memory_space<vmem>>, vector<64x128xbf16>
    %cst = arith.constant dense<0.000000e+00> : vector<128x128xf32>
    %7 = tpu.matmul %5, %6, %cst {dimension_numbers = #tpu.dot_dimension_numbers<[1], [0], [0], [1], [0, 0, 1, 1], [], []>} : vector<128x64xbf16>, vector<64x128xbf16>, vector<128x128xf32> -> vector<128x128xf32>
    %c0_10 = arith.constant 0 : index
    %c0_11 = arith.constant 0 : index
    %8 = vector.load %arg4[%c0_10, %c0_11] : memref<1x128xf32, #tpu.memory_space<vmem>>, vector<1x128xf32>
    %9 = vector.broadcast %8 : vector<1x128xf32> to vector<128x128xf32>
    %10 = arith.addf %7, %9 : vector<128x128xf32>
    %cst_12 = arith.constant 0.000000e+00 : f32
    %11 = vector.broadcast %cst_12 : f32 to vector<128x128xf32>
    %12 = arith.cmpf ogt, %10, %11 : vector<128x128xf32>
    %cst_13 = arith.constant 0.000000e+00 : f32
    %13 = vector.broadcast %cst_13 : f32 to vector<128x128xf32>
    %14 = arith.minimumf %10, %13 : vector<128x128xf32>
    %15 = math.exp %14 : vector<128x128xf32>
    %cst_14 = arith.constant 1.000000e+00 : f32
    %16 = vector.broadcast %cst_14 : f32 to vector<128x128xf32>
    %17 = arith.subf %15, %16 : vector<128x128xf32>
    %18 = arith.select %12, %10, %17 : vector<128x128xi1>, vector<128x128xf32>
    %19 = arith.truncf %18 : vector<128x128xf32> to vector<128x128xbf16>
    %c0_15 = arith.constant 0 : index
    %c0_16 = arith.constant 0 : index
    %20 = vector.load %arg5[%c0_15, %c0_16] : memref<128x128xbf16, #tpu.memory_space<vmem>>, vector<128x128xbf16>
    %cst_17 = arith.constant dense<0.000000e+00> : vector<128x128xf32>
    %21 = tpu.matmul %19, %20, %cst_17 {dimension_numbers = #tpu.dot_dimension_numbers<[1], [0], [0], [1], [0, 0, 1, 1], [], []>} : vector<128x128xbf16>, vector<128x128xbf16>, vector<128x128xf32> -> vector<128x128xf32>
    %c0_18 = arith.constant 0 : index
    %c0_19 = arith.constant 0 : index
    %22 = vector.load %arg6[%c0_18, %c0_19] : memref<1x128xf32, #tpu.memory_space<vmem>>, vector<1x128xf32>
    %23 = vector.broadcast %22 : vector<1x128xf32> to vector<128x128xf32>
    %24 = arith.addf %21, %23 : vector<128x128xf32>
    %cst_20 = arith.constant 0.000000e+00 : f32
    %25 = vector.broadcast %cst_20 : f32 to vector<128x128xf32>
    %26 = arith.cmpf ogt, %24, %25 : vector<128x128xf32>
    %cst_21 = arith.constant 0.000000e+00 : f32
    %27 = vector.broadcast %cst_21 : f32 to vector<128x128xf32>
    %28 = arith.minimumf %24, %27 : vector<128x128xf32>
    %29 = math.exp %28 : vector<128x128xf32>
    %cst_22 = arith.constant 1.000000e+00 : f32
    %30 = vector.broadcast %cst_22 : f32 to vector<128x128xf32>
    %31 = arith.subf %29, %30 : vector<128x128xf32>
    %32 = arith.select %26, %24, %31 : vector<128x128xi1>, vector<128x128xf32>
    %33 = arith.truncf %32 : vector<128x128xf32> to vector<128x128xbf16>
    %c0_23 = arith.constant 0 : index
    %c0_24 = arith.constant 0 : index
    %34 = vector.load %arg7[%c0_23, %c0_24] : memref<128x128xbf16, #tpu.memory_space<vmem>>, vector<128x128xbf16>
    %cst_25 = arith.constant dense<0.000000e+00> : vector<128x128xf32>
    %35 = tpu.matmul %33, %34, %cst_25 {dimension_numbers = #tpu.dot_dimension_numbers<[1], [0], [0], [1], [0, 0, 1, 1], [], []>} : vector<128x128xbf16>, vector<128x128xbf16>, vector<128x128xf32> -> vector<128x128xf32>
    %c0_26 = arith.constant 0 : index
    %c0_27 = arith.constant 0 : index
    %36 = vector.load %arg8[%c0_26, %c0_27] : memref<1x128xf32, #tpu.memory_space<vmem>>, vector<1x128xf32>
    %37 = vector.broadcast %36 : vector<1x128xf32> to vector<128x128xf32>
    %38 = arith.addf %35, %37 : vector<128x128xf32>
    %cst_28 = arith.constant 0.000000e+00 : f32
    %39 = vector.broadcast %cst_28 : f32 to vector<128x128xf32>
    %40 = arith.cmpf ogt, %38, %39 : vector<128x128xf32>
    %cst_29 = arith.constant 0.000000e+00 : f32
    %41 = vector.broadcast %cst_29 : f32 to vector<128x128xf32>
    %42 = arith.minimumf %38, %41 : vector<128x128xf32>
    %43 = math.exp %42 : vector<128x128xf32>
    %cst_30 = arith.constant 1.000000e+00 : f32
    %44 = vector.broadcast %cst_30 : f32 to vector<128x128xf32>
    %45 = arith.subf %43, %44 : vector<128x128xf32>
    %46 = arith.select %40, %38, %45 : vector<128x128xi1>, vector<128x128xf32>
    %c0_31 = arith.constant 0 : index
    %c0_32 = arith.constant 0 : index
    %47 = vector.load %arg9[%c0_31, %c0_32] : memref<1x128xf32, #tpu.memory_space<vmem>>, vector<1x128xf32>
    %48 = tpu.transpose %46, [1, 0] : vector<128x128xf32> -> vector<128x128xf32>
    %cst_33 = arith.constant dense<0.000000e+00> : vector<1x128xf32>
    %49 = tpu.matmul %47, %48, %cst_33 {dimension_numbers = #tpu.dot_dimension_numbers<[1], [0], [0], [1], [0, 0, 1, 1], [], []>} : vector<1x128xf32>, vector<128x128xf32>, vector<1x128xf32> -> vector<1x128xf32>
    %c0_34 = arith.constant 0 : index
    %c0_35 = arith.constant 0 : index
    %50 = memref.load %arg10[%c0_34, %c0_35] : memref<1x1xf32, #tpu.memory_space<smem>>
    %51 = vector.broadcast %50 : f32 to vector<1x128xf32>
    %52 = arith.addf %49, %51 : vector<1x128xf32>
    %c0_36 = arith.constant 0 : index
    %c0_37 = arith.constant 0 : index
    %53 = vector.load %arg11[%c0_36, %c0_37] : memref<1x128xf32, #tpu.memory_space<vmem>>, vector<1x128xf32>
    tpu.vector_store %arg11[%c0_36, %c0_37], %52 {strides = array<i32>} : memref<1x128xf32, #tpu.memory_space<vmem>>, vector<1x128xf32>,
    return
  }
  func.func @transform_0(%arg0: i32) -> (i32, i32) {
    %c0_i32 = arith.constant 0 : i32
    %c0_i32_0 = arith.constant 0 : i32
    return %arg0, %c0_i32 : i32, i32
  }
  func.func @transform_1(%arg0: i32) -> (i32, i32) {
    %c0_i32 = arith.constant 0 : i32
    %c0_i32_0 = arith.constant 0 : i32
    return %arg0, %c0_i32 : i32, i32
  }
  func.func @transform_2(%arg0: i32) -> (i32, i32) {
    %c0_i32 = arith.constant 0 : i32
    %c0_i32_0 = arith.constant 0 : i32
    %c0_i32_1 = arith.constant 0 : i32
    return %c0_i32, %c0_i32_0 : i32, i32
  }
  func.func @transform_3(%arg0: i32) -> (i32, i32) {
    %c0_i32 = arith.constant 0 : i32
    %c0_i32_0 = arith.constant 0 : i32
    %c0_i32_1 = arith.constant 0 : i32
    return %c0_i32, %c0_i32_0 : i32, i32
  }
  func.func @transform_4(%arg0: i32) -> (i32, i32) {
    %c0_i32 = arith.constant 0 : i32
    %c0_i32_0 = arith.constant 0 : i32
    %c0_i32_1 = arith.constant 0 : i32
    return %c0_i32, %c0_i32_0 : i32, i32
  }
  func.func @transform_5(%arg0: i32) -> (i32, i32) {
    %c0_i32 = arith.constant 0 : i32
    %c0_i32_0 = arith.constant 0 : i32
    %c0_i32_1 = arith.constant 0 : i32
    return %c0_i32, %c0_i32_0 : i32, i32
  }
  func.func @transform_6(%arg0: i32) -> (i32, i32) {
    %c0_i32 = arith.constant 0 : i32
    %c0_i32_0 = arith.constant 0 : i32
    %c0_i32_1 = arith.constant 0 : i32
    return %c0_i32, %c0_i32_0 : i32, i32
  }
  func.func @transform_7(%arg0: i32) -> (i32, i32) {
    %c0_i32 = arith.constant 0 : i32
    %c0_i32_0 = arith.constant 0 : i32
    %c0_i32_1 = arith.constant 0 : i32
    return %c0_i32, %c0_i32_0 : i32, i32
  }
  func.func @transform_8(%arg0: i32) -> (i32, i32) {
    %c0_i32 = arith.constant 0 : i32
    %c0_i32_0 = arith.constant 0 : i32
    %c0_i32_1 = arith.constant 0 : i32
    return %c0_i32, %c0_i32_0 : i32, i32
  }
  func.func @transform_9(%arg0: i32) -> (i32, i32) {
    %c0_i32 = arith.constant 0 : i32
    %c0_i32_0 = arith.constant 0 : i32
    %c0_i32_1 = arith.constant 0 : i32
    return %c0_i32, %c0_i32_0 : i32, i32
  }
  func.func @transform_10(%arg0: i32) -> (i32, i32) {
    %c0_i32 = arith.constant 0 : i32
    %c0_i32_0 = arith.constant 0 : i32
    return %c0_i32, %arg0 : i32, i32
  }
}

</mosaic_0001>

<llo_original>
// kernel: tpu_custom_call.1
$region0: #{tpu_custom_call.1}
  #allocation0 [shape = 'u32[]', space=smem, size = 0x4, offset = 0x4, fixed_abs, tag = 'smem constant byte address 0x4 - core index']
  #allocation1 [shape = 'u32[144,128]{1,0:T(1,128)}', space=vmem, size = 0x12000, scoped, tag = 'internal scratch']
  #allocation2 [shape = 'f32[128,64]{1,0:T(8,128)}', space=vmem, size = 0x10000, scoped, tag = 'scratch operand']
  #allocation3 [shape = 'f32[1,1]{1,0:T(1,128)S(6)}', space=smem, size = 0x200, scoped, tag = 'scoped memory for tpu_custom_call.1']
  %s0 = inlined_call_operand.vmem [shape: f32[256,16], index: 0, kind: input, shape index: {}]
  %s1 = inlined_call_operand.vmem [shape: f32[256,48], index: 1, kind: input, shape index: {}]
  %s2 = inlined_call_operand.vmem [shape: bf16[64,128], index: 2, kind: input, shape index: {}]
  %s3 = inlined_call_operand.vmem [shape: f32[1,128], index: 3, kind: input, shape index: {}]
  %s4 = inlined_call_operand.vmem [shape: bf16[128,128], index: 4, kind: input, shape index: {}]
  %s5 = inlined_call_operand.vmem [shape: f32[1,128], index: 5, kind: input, shape index: {}]
  %s6 = inlined_call_operand.vmem [shape: bf16[128,128], index: 6, kind: input, shape index: {}]
  %s7 = inlined_call_operand.vmem [shape: f32[1,128], index: 7, kind: input, shape index: {}]
  %s8 = inlined_call_operand.vmem [shape: f32[1,128], index: 8, kind: input, shape index: {}]
  %s9 = inlined_call_operand.<no memory space> [shape: f32[1,1], index: 9, kind: input, shape index: {}]
  %s10 = inlined_call_operand.hbm [shape: f32[1,256], index: 10, kind: output, shape index: {}]
  %s11 = sld [smem:[#allocation0]]
  $region73: #{tpu_custom_call.1} parent=0
    _
  %s13 = ssub.s32 1, %s11
  %s14 = scalar_select 0, %s13, %s11
  %15 = sst [smem:[#allocation3]] %s9
  $region1: #{tpu_custom_call.1} parent=0
    #allocation4 [shape = 'u8[1024]{0}', space=vmem, size = 0x400, scoped, tag = 'output window, operand 0']
    #allocation5 [shape = 's32[2]{0}', space=sflag, size = 0x8, scoped, tag = 'scoped memory for tpu_custom_call.1']
    %16 = vsyncpa [#allocation5], 0
    %s17 = scalar_lea.sflag [#allocation5], 1
    %18 = vsyncpa %s17, 0
    loop: start=0, step=1, limit=4
    $region2: #{tpu_custom_call.1} parent=1 // loop_pre_header
      _
    $region3: #{tpu_custom_call.1} parent=1 // loop_header
      %s20 = sphi 0, %s24
      %p21 = scmp.ge.s32.totalorder %s20, 4
      %s30 = sphi 0, %s32
      %s33 = sphi 0, %s30
      %s34 = sphi 0, %s33
      %s50 = sphi 0, %s34
      %s56 = sphi 0, %s58
      %s59 = sphi 0, %s56
      %s60 = sphi 0, %s59
      %s76 = sphi 0, %s60
      %s80 = sphi 0, %s80
      %s82 = sphi 0, %s80
      %s83 = sphi 0, %s82
      %s97 = sphi 0, %s83
      %s101 = sphi 0, %s101
      %s103 = sphi 0, %s101
      %s104 = sphi 0, %s103
      %s118 = sphi 0, %s104
      %s122 = sphi 0, %s122
      %s124 = sphi 0, %s122
      %s125 = sphi 0, %s124
      %s139 = sphi 0, %s125
      %s143 = sphi 0, %s143
      %s145 = sphi 0, %s143
      %s146 = sphi 0, %s145
      %s160 = sphi 0, %s146
      %s164 = sphi 0, %s164
      %s166 = sphi 0, %s164
      %s167 = sphi 0, %s166
      %s181 = sphi 0, %s167
      %s185 = sphi 0, %s185
      %s187 = sphi 0, %s185
      %s188 = sphi 0, %s187
      %s202 = sphi 0, %s188
      %s206 = sphi 0, %s206
      %s208 = sphi 0, %s206
      %s209 = sphi 0, %s208
      %s223 = sphi 0, %s209
      %s227 = sphi 0, %s227
      %s229 = sphi 0, %s227
      %s230 = sphi 0, %s229
      %s244 = sphi 0, %s230
      %s250 = sphi 0, %s252
      %s253 = sphi 0, %s250
      %s254 = sphi 0, %s253
      %s270 = sphi 0, %s254
    $region4: #{tpu_custom_call.1} parent=1 // loop_header_branch
      %23 = sbr.rel (%p21) target = $region8
    $region5: #{tpu_custom_call.1} parent=1 // loop_body
      %s25 = ssub.s32 %s20, 1
      %s26 = ssub.s32 %s20, 2
      %s27 = sadd.s32 %s20, 1
      %s28 = ssub.s32 %s20, %s27
      %p29 = scmp.eq.s32.totalorder %s28, 0
      %s31 = sadd.s32 %s30, 1
      %s32 = scalar_select %p29, %s30, %s31
      %p35 = pneg %p29
      %p36 = scmp.eq.s32.totalorder %s20, 1
      %p37 = por %p35, %p36
      %p38 = scmp.ne.s32.totalorder %s30, %s33
      %p39 = scmp.eq.s32.totalorder %s20, 0
      %p40 = por %p38, %p39
      %p41 = scmp.ne.s32.totalorder %s30, %s33
      %p42 = scmp.eq.s32.totalorder %s25, 1
      %p43 = por %p41, %p42
      %p44 = scmp.ne.s32.totalorder %s33, %s34
      %p45 = scmp.eq.s32.totalorder %s25, 0
      %p46 = por %p44, %p45
      %p47 = scmp.ne.s32.totalorder %s33, %s34
      %p48 = scmp.eq.s32.totalorder %s26, 1
      %p49 = por %p47, %p48
      %p51 = scmp.ne.s32.totalorder %s34, %s50
      %p52 = scmp.eq.s32.totalorder %s26, 0
      %p53 = por %p51, %p52
      %s54 = ssub.s32 %s20, %s27
      %p55 = scmp.eq.s32.totalorder %s54, 0
      %s57 = sadd.s32 %s56, 1
      %s58 = scalar_select %p55, %s56, %s57
      %p61 = pneg %p55
      %p62 = scmp.eq.s32.totalorder %s20, 1
      %p63 = por %p61, %p62
      %p64 = scmp.ne.s32.totalorder %s56, %s59
      %p65 = scmp.eq.s32.totalorder %s20, 0
      %p66 = por %p64, %p65
      %p67 = scmp.ne.s32.totalorder %s56, %s59
      %p68 = scmp.eq.s32.totalorder %s25, 1
      %p69 = por %p67, %p68
      %p70 = scmp.ne.s32.totalorder %s59, %s60
      %p71 = scmp.eq.s32.totalorder %s25, 0
      %p72 = por %p70, %p71
      %p73 = scmp.ne.s32.totalorder %s59, %s60
      %p74 = scmp.eq.s32.totalorder %s26, 1
      %p75 = por %p73, %p74
      %p77 = scmp.ne.s32.totalorder %s60, %s76
      %p78 = scmp.eq.s32.totalorder %s26, 0
      %p79 = por %p77, %p78
      %s81 = sadd.s32 %s80, 1
      %p84 = scmp.eq.s32.totalorder %s20, 1
      %p85 = scmp.ne.s32.totalorder %s80, %s82
      %p86 = scmp.eq.s32.totalorder %s20, 0
      %p87 = por %p85, %p86
      %p88 = scmp.ne.s32.totalorder %s80, %s82
      %p89 = scmp.eq.s32.totalorder %s25, 1
      %p90 = por %p88, %p89
      %p91 = scmp.ne.s32.totalorder %s82, %s83
      %p92 = scmp.eq.s32.totalorder %s25, 0
      %p93 = por %p91, %p92
      %p94 = scmp.ne.s32.totalorder %s82, %s83
      %p95 = scmp.eq.s32.totalorder %s26, 1
      %p96 = por %p94, %p95
      %p98 = scmp.ne.s32.totalorder %s83, %s97
      %p99 = scmp.eq.s32.totalorder %s26, 0
      %p100 = por %p98, %p99
      %s102 = sadd.s32 %s101, 1
      %p105 = scmp.eq.s32.totalorder %s20, 1
      %p106 = scmp.ne.s32.totalorder %s101, %s103
      %p107 = scmp.eq.s32.totalorder %s20, 0
      %p108 = por %p106, %p107
      %p109 = scmp.ne.s32.totalorder %s101, %s103
      %p110 = scmp.eq.s32.totalorder %s25, 1
      %p111 = por %p109, %p110
      %p112 = scmp.ne.s32.totalorder %s103, %s104
      %p113 = scmp.eq.s32.totalorder %s25, 0
      %p114 = por %p112, %p113
      %p115 = scmp.ne.s32.totalorder %s103, %s104
      %p116 = scmp.eq.s32.totalorder %s26, 1
      %p117 = por %p115, %p116
      %p119 = scmp.ne.s32.totalorder %s104, %s118
      %p120 = scmp.eq.s32.totalorder %s26, 0
      %p121 = por %p119, %p120
      %s123 = sadd.s32 %s122, 1
      %p126 = scmp.eq.s32.totalorder %s20, 1
      %p127 = scmp.ne.s32.totalorder %s122, %s124
      %p128 = scmp.eq.s32.totalorder %s20, 0
      %p129 = por %p127, %p128
      %p130 = scmp.ne.s32.totalorder %s122, %s124
      %p131 = scmp.eq.s32.totalorder %s25, 1
      %p132 = por %p130, %p131
      %p133 = scmp.ne.s32.totalorder %s124, %s125
      %p134 = scmp.eq.s32.totalorder %s25, 0
      %p135 = por %p133, %p134
      %p136 = scmp.ne.s32.totalorder %s124, %s125
      %p137 = scmp.eq.s32.totalorder %s26, 1
      %p138 = por %p136, %p137
      %p140 = scmp.ne.s32.totalorder %s125, %s139
      %p141 = scmp.eq.s32.totalorder %s26, 0
      %p142 = por %p140, %p141
      %s144 = sadd.s32 %s143, 1
      %p147 = scmp.eq.s32.totalorder %s20, 1
      %p148 = scmp.ne.s32.totalorder %s143, %s145
      %p149 = scmp.eq.s32.totalorder %s20, 0
      %p150 = por %p148, %p149
      %p151 = scmp.ne.s32.totalorder %s143, %s145
      %p152 = scmp.eq.s32.totalorder %s25, 1
      %p153 = por %p151, %p152
      %p154 = scmp.ne.s32.totalorder %s145, %s146
      %p155 = scmp.eq.s32.totalorder %s25, 0
      %p156 = por %p154, %p155
      %p157 = scmp.ne.s32.totalorder %s145, %s146
      %p158 = scmp.eq.s32.totalorder %s26, 1
      %p159 = por %p157, %p158
      %p161 = scmp.ne.s32.totalorder %s146, %s160
      %p162 = scmp.eq.s32.totalorder %s26, 0
      %p163 = por %p161, %p162
      %s165 = sadd.s32 %s164, 1
      %p168 = scmp.eq.s32.totalorder %s20, 1
      %p169 = scmp.ne.s32.totalorder %s164, %s166
      %p170 = scmp.eq.s32.totalorder %s20, 0
      %p171 = por %p169, %p170
      %p172 = scmp.ne.s32.totalorder %s164, %s166
      %p173 = scmp.eq.s32.totalorder %s25, 1
      %p174 = por %p172, %p173
      %p175 = scmp.ne.s32.totalorder %s166, %s167
      %p176 = scmp.eq.s32.totalorder %s25, 0
      %p177 = por %p175, %p176
      %p178 = scmp.ne.s32.totalorder %s166, %s167
      %p179 = scmp.eq.s32.totalorder %s26, 1
      %p180 = por %p178, %p179
      %p182 = scmp.ne.s32.totalorder %s167, %s181
      %p183 = scmp.eq.s32.totalorder %s26, 0
      %p184 = por %p182, %p183
      %s186 = sadd.s32 %s185, 1
      %p189 = scmp.eq.s32.totalorder %s20, 1
      %p190 = scmp.ne.s32.totalorder %s185, %s187
      %p191 = scmp.eq.s32.totalorder %s20, 0
      %p192 = por %p190, %p191
      %p193 = scmp.ne.s32.totalorder %s185, %s187
      %p194 = scmp.eq.s32.totalorder %s25, 1
      %p195 = por %p193, %p194
      %p196 = scmp.ne.s32.totalorder %s187, %s188
      %p197 = scmp.eq.s32.totalorder %s25, 0
      %p198 = por %p196, %p197
      %p199 = scmp.ne.s32.totalorder %s187, %s188
      %p200 = scmp.eq.s32.totalorder %s26, 1
      %p201 = por %p199, %p200
      %p203 = scmp.ne.s32.totalorder %s188, %s202
      %p204 = scmp.eq.s32.totalorder %s26, 0
      %p205 = por %p203, %p204
      %s207 = sadd.s32 %s206, 1
      %p210 = scmp.eq.s32.totalorder %s20, 1
      %p211 = scmp.ne.s32.totalorder %s206, %s208
      %p212 = scmp.eq.s32.totalorder %s20, 0
      %p213 = por %p211, %p212
      %p214 = scmp.ne.s32.totalorder %s206, %s208
      %p215 = scmp.eq.s32.totalorder %s25, 1
      %p216 = por %p214, %p215
      %p217 = scmp.ne.s32.totalorder %s208, %s209
      %p218 = scmp.eq.s32.totalorder %s25, 0
      %p219 = por %p217, %p218
      %p220 = scmp.ne.s32.totalorder %s208, %s209
      %p221 = scmp.eq.s32.totalorder %s26, 1
      %p222 = por %p220, %p221
      %p224 = scmp.ne.s32.totalorder %s209, %s223
      %p225 = scmp.eq.s32.totalorder %s26, 0
      %p226 = por %p224, %p225
      %s228 = sadd.s32 %s227, 1
      %p231 = scmp.eq.s32.totalorder %s20, 1
      %p232 = scmp.ne.s32.totalorder %s227, %s229
      %p233 = scmp.eq.s32.totalorder %s20, 0
      %p234 = por %p232, %p233
      %p235 = scmp.ne.s32.totalorder %s227, %s229
      %p236 = scmp.eq.s32.totalorder %s25, 1
      %p237 = por %p235, %p236
      %p238 = scmp.ne.s32.totalorder %s229, %s230
      %p239 = scmp.eq.s32.totalorder %s25, 0
      %p240 = por %p238, %p239
      %p241 = scmp.ne.s32.totalorder %s229, %s230
      %p242 = scmp.eq.s32.totalorder %s26, 1
      %p243 = por %p241, %p242
      %p245 = scmp.ne.s32.totalorder %s230, %s244
      %p246 = scmp.eq.s32.totalorder %s26, 0
      %p247 = por %p245, %p246
      %s248 = ssub.s32 %s20, %s27
      %p249 = scmp.eq.s32.totalorder %s248, 0
      %s251 = sadd.s32 %s250, 1
      %s252 = scalar_select %p249, %s250, %s251
      %p255 = pneg %p249
      %p256 = scmp.eq.s32.totalorder %s20, 1
      %p257 = por %p255, %p256
      %p258 = scmp.ne.s32.totalorder %s250, %s253
      %p259 = scmp.eq.s32.totalorder %s20, 0
      %p260 = por %p258, %p259
      %p261 = scmp.ne.s32.totalorder %s250, %s253
      %p262 = scmp.eq.s32.totalorder %s25, 1
      %p263 = por %p261, %p262
      %p264 = scmp.ne.s32.totalorder %s253, %s254
      %p265 = scmp.eq.s32.totalorder %s25, 0
      %p266 = por %p264, %p265
      %p267 = scmp.ne.s32.totalorder %s253, %s254
      %p268 = scmp.eq.s32.totalorder %s26, 1
      %p269 = por %p267, %p268
      %p271 = scmp.ne.s32.totalorder %s254, %s270
      %p272 = scmp.eq.s32.totalorder %s26, 0
      %p273 = por %p271, %p272
      %p274 = scmp.le.s32.totalorder 1, %s20
      %p275 = scmp.lt.s32.totalorder %s20, 3
      %p276 = pnand %p274, %p275
      %p277 = pneg %p276
      // Predicated region
      $region9: #{tpu_custom_call.1} parent=5 // pred_check
        _
      $region10: #{tpu_custom_call.1} parent=5 // pred_check_branch
        %279 = sbr.rel (%p276) target = $region12
      $region11: #{tpu_custom_call.1} parent=5 // pred_region
        %s280 = ssub.s32 %s20, 1
        // Predicated region
        $region13: #{tpu_custom_call.1} parent=11 // pred_check
          %p281 = pneg %p93
        $region14: #{tpu_custom_call.1} parent=11 // pred_check_branch
          %283 = sbr.rel (%p281) target = $region16
        $region15: #{tpu_custom_call.1} parent=11 // pred_region
          _
        $region16: #{tpu_custom_call.1} parent=11 // pred_fallthru
          _
        // Predicated region
        $region17: #{tpu_custom_call.1} parent=11 // pred_check
          %p284 = pneg %p114
        $region18: #{tpu_custom_call.1} parent=11 // pred_check_branch
          %286 = sbr.rel (%p284) target = $region20
        $region19: #{tpu_custom_call.1} parent=11 // pred_region
          _
        $region20: #{tpu_custom_call.1} parent=11 // pred_fallthru
          _
        // Predicated region
        $region21: #{tpu_custom_call.1} parent=11 // pred_check
          %p287 = pneg %p135
        $region22: #{tpu_custom_call.1} parent=11 // pred_check_branch
          %289 = sbr.rel (%p287) target = $region24
        $region23: #{tpu_custom_call.1} parent=11 // pred_region
          _
        $region24: #{tpu_custom_call.1} parent=11 // pred_fallthru
          _
        // Predicated region
        $region25: #{tpu_custom_call.1} parent=11 // pred_check
          %p290 = pneg %p156
        $region26: #{tpu_custom_call.1} parent=11 // pred_check_branch
          %292 = sbr.rel (%p290) target = $region28
        $region27: #{tpu_custom_call.1} parent=11 // pred_region
          _
        $region28: #{tpu_custom_call.1} parent=11 // pred_fallthru
          _
        // Predicated region
        $region29: #{tpu_custom_call.1} parent=11 // pred_check
          %p293 = pneg %p177
        $region30: #{tpu_custom_call.1} parent=11 // pred_check_branch
          %295 = sbr.rel (%p293) target = $region32
        $region31: #{tpu_custom_call.1} parent=11 // pred_region
          _
        $region32: #{tpu_custom_call.1} parent=11 // pred_fallthru
          _
        // Predicated region
        $region33: #{tpu_custom_call.1} parent=11 // pred_check
          %p296 = pneg %p198
        $region34: #{tpu_custom_call.1} parent=11 // pred_check_branch
          %298 = sbr.rel (%p296) target = $region36
        $region35: #{tpu_custom_call.1} parent=11 // pred_region
          _
        $region36: #{tpu_custom_call.1} parent=11 // pred_fallthru
          _
        // Predicated region
        $region37: #{tpu_custom_call.1} parent=11 // pred_check
          %p299 = pneg %p219
        $region38: #{tpu_custom_call.1} parent=11 // pred_check_branch
          %301 = sbr.rel (%p299) target = $region40
        $region39: #{tpu_custom_call.1} parent=11 // pred_region
          _
        $region40: #{tpu_custom_call.1} parent=11 // pred_fallthru
          _
        // Predicated region
        $region41: #{tpu_custom_call.1} parent=11 // pred_check
          %p302 = pneg %p240
        $region42: #{tpu_custom_call.1} parent=11 // pred_check_branch
          %304 = sbr.rel (%p302) target = $region44
        $region43: #{tpu_custom_call.1} parent=11 // pred_region
          _
        $region44: #{tpu_custom_call.1} parent=11 // pred_fallthru
          _
      $region12: #{tpu_custom_call.1} parent=5 // pred_fallthru
        _
      %p305 = scmp.lt.s32.totalorder %s20, 2
      // Predicated region
      $region45: #{tpu_custom_call.1} parent=5 // pred_check
        %p306 = pneg %p305
      $region46: #{tpu_custom_call.1} parent=5 // pred_check_branch
        %308 = sbr.rel (%p306) target = $region48
      $region47: #{tpu_custom_call.1} parent=5 // pred_region
        // Predicated region
        $region49: #{tpu_custom_call.1} parent=47 // pred_check
          %p309 = pneg %p40
        $region50: #{tpu_custom_call.1} parent=47 // pred_check_branch
          %311 = sbr.rel (%p309) target = $region52
        $region51: #{tpu_custom_call.1} parent=47 // pred_region
          %s312 = smul.u32 16, %s20
          %p313 = scmp.lt.s32.totalorder %s312, 31
          %s314 = scalar_select %p313, %s312, 31
          %s315 = smul.addr %s314, 8
          %s316 = scalar_lea.vmem %s0, %s315
          %s317 = smul.u32 16, %s20
        $region52: #{tpu_custom_call.1} parent=47 // pred_fallthru
          _
        // Predicated region
        $region53: #{tpu_custom_call.1} parent=47 // pred_check
          %p318 = pneg %p66
        $region54: #{tpu_custom_call.1} parent=47 // pred_check_branch
          %320 = sbr.rel (%p318) target = $region56
        $region55: #{tpu_custom_call.1} parent=47 // pred_region
          %s321 = smul.u32 16, %s20
          %p322 = scmp.lt.s32.totalorder %s321, 31
          %s323 = scalar_select %p322, %s321, 31
          %s324 = smul.addr %s323, 8
          %s325 = scalar_lea.vmem %s1, %s324
          %s326 = smul.u32 16, %s20
        $region56: #{tpu_custom_call.1} parent=47 // pred_fallthru
          _
      $region48: #{tpu_custom_call.1} parent=5 // pred_fallthru
        _
      %p327 = scmp.le.s32.totalorder 1, %s20
      %p328 = scmp.lt.s32.totalorder %s20, 3
      %p329 = pnand %p327, %p328
      %p330 = pneg %p329
      // Predicated region
      $region57: #{tpu_custom_call.1} parent=5 // pred_check
        _
      $region58: #{tpu_custom_call.1} parent=5 // pred_check_branch
        %332 = sbr.rel (%p329) target = $region60
      $region59: #{tpu_custom_call.1} parent=5 // pred_region
        %s333 = ssub.s32 %s20, 1
        %s334 = smul.u32 16, %s25
        %p335 = scmp.lt.s32.totalorder %s334, 31
        %s336 = scalar_select %p335, %s334, 31
        %s337 = smul.addr %s336, 8
        %s338 = scalar_lea.vmem %s0, %s337
        %p339 = pneg %p46
        %p340 = pneg %p43
        %s341 = smul.u32 16, %s25
        %p342 = scmp.lt.s32.totalorder %s341, 31
        %s343 = scalar_select %p342, %s341, 31
        %s344 = smul.addr %s343, 8
        %s345 = scalar_lea.vmem %s1, %s344
        %p346 = pneg %p72
        %p347 = pneg %p69
        %p348 = pneg %p93
        %p349 = pneg %p90
        %p350 = pneg %p114
        %p351 = pneg %p111
        %p352 = pneg %p135
        %p353 = pneg %p132
        %p354 = pneg %p156
        %p355 = pneg %p153
        %p356 = pneg %p177
        %p357 = pneg %p174
        %p358 = pneg %p198
        %p359 = pneg %p195
        %p360 = pneg %p219
        %p361 = pneg %p216
        %p362 = pneg %p240
        %p363 = pneg %p237
        %p364 = pneg %p266
        %p365 = pneg %p263
        %s366 = sand.u32 %s253, 1
        %s367 = scalar_lea.sflag [#allocation5], %s366
        %s368 = sand.u32 %s253, 1
        %s369 = scalar_lea.vmem [#allocation4], %s368
        %s370 = smul.u32 16, %s25
        %p371 = scmp.lt.s32.totalorder %s370, 31
        %s372 = scalar_select %p371, %s370, 31
        %s373 = smul.addr %s372, 8
        %s374 = scalar_lea.vmem %s0, %s373
        %s375 = smul.u32 16, %s25
        %s376 = smul.u32 16, %s25
        %p377 = scmp.lt.s32.totalorder %s376, 31
        %s378 = scalar_select %p377, %s376, 31
        %s379 = smul.addr %s378, 8
        %s380 = scalar_lea.vmem %s1, %s379
        %s381 = smul.u32 16, %s25
        %v383 = vld [vmem:[%s374] sm:$0xff]
        %v384 = vld [vmem:[%s374 + $0x8] sm:$0xff]
        %v385 = vld [vmem:[%s374 + $0x10] sm:$0xff]
        %v386 = vld [vmem:[%s374 + $0x18] sm:$0xff]
        %v387 = vld [vmem:[%s374 + $0x20] sm:$0xff]
        %v388 = vld [vmem:[%s374 + $0x28] sm:$0xff]
        %v389 = vld [vmem:[%s374 + $0x30] sm:$0xff]
        %v390 = vld [vmem:[%s374 + $0x38] sm:$0xff]
        %v391 = vld [vmem:[%s374 + $0x40] sm:$0xff]
        %v392 = vld [vmem:[%s374 + $0x48] sm:$0xff]
        %v393 = vld [vmem:[%s374 + $0x50] sm:$0xff]
        %v394 = vld [vmem:[%s374 + $0x58] sm:$0xff]
        %v395 = vld [vmem:[%s374 + $0x60] sm:$0xff]
        %v396 = vld [vmem:[%s374 + $0x68] sm:$0xff]
        %v397 = vld [vmem:[%s374 + $0x70] sm:$0xff]
        %v398 = vld [vmem:[%s374 + $0x78] sm:$0xff]
        %vm399 = vcmask 130048
        %400 = vst.msk [vmem:[#allocation2] sm:$0xff] %vm399, %v383
        %401 = vst.msk [vmem:[#allocation2 + $0x8] sm:$0xff] %vm399, %v384
        %402 = vst.msk [vmem:[#allocation2 + $0x10] sm:$0xff] %vm399, %v385
        %403 = vst.msk [vmem:[#allocation2 + $0x18] sm:$0xff] %vm399, %v386
        %404 = vst.msk [vmem:[#allocation2 + $0x20] sm:$0xff] %vm399, %v387
        %405 = vst.msk [vmem:[#allocation2 + $0x28] sm:$0xff] %vm399, %v388
        %406 = vst.msk [vmem:[#allocation2 + $0x30] sm:$0xff] %vm399, %v389
        %407 = vst.msk [vmem:[#allocation2 + $0x38] sm:$0xff] %vm399, %v390
        %408 = vst.msk [vmem:[#allocation2 + $0x40] sm:$0xff] %vm399, %v391
        %409 = vst.msk [vmem:[#allocation2 + $0x48] sm:$0xff] %vm399, %v392
        %410 = vst.msk [vmem:[#allocation2 + $0x50] sm:$0xff] %vm399, %v393
        %411 = vst.msk [vmem:[#allocation2 + $0x58] sm:$0xff] %vm399, %v394
        %412 = vst.msk [vmem:[#allocation2 + $0x60] sm:$0xff] %vm399, %v395
        %413 = vst.msk [vmem:[#allocation2 + $0x68] sm:$0xff] %vm399, %v396
        %414 = vst.msk [vmem:[#allocation2 + $0x70] sm:$0xff] %vm399, %v397
        %415 = vst.msk [vmem:[#allocation2 + $0x78] sm:$0xff] %vm399, %v398
        %v416 = vld [vmem:[%s380] sm:$0xff]
        %v417 = vld [vmem:[%s380 + $0x8] sm:$0xff]
        %v418 = vld [vmem:[%s380 + $0x10] sm:$0xff]
        %v419 = vld [vmem:[%s380 + $0x18] sm:$0xff]
        %v420 = vld [vmem:[%s380 + $0x20] sm:$0xff]
        %v421 = vld [vmem:[%s380 + $0x28] sm:$0xff]
        %v422 = vld [vmem:[%s380 + $0x30] sm:$0xff]
        %v423 = vld [vmem:[%s380 + $0x38] sm:$0xff]
        %v424 = vld [vmem:[%s380 + $0x40] sm:$0xff]
        %v425 = vld [vmem:[%s380 + $0x48] sm:$0xff]
        %v426 = vld [vmem:[%s380 + $0x50] sm:$0xff]
        %v427 = vld [vmem:[%s380 + $0x58] sm:$0xff]
        %v428 = vld [vmem:[%s380 + $0x60] sm:$0xff]
        %v429 = vld [vmem:[%s380 + $0x68] sm:$0xff]
        %v430 = vld [vmem:[%s380 + $0x70] sm:$0xff]
        %v431 = vld [vmem:[%s380 + $0x78] sm:$0xff]
        %448 = vrot.lane.b32.xlu0 %v416, 16
        %v449 = vpop.permute.xlu0 %448
        %450 = vrot.lane.b32.xlu0 %v417, 16
        %v451 = vpop.permute.xlu0 %450
        %452 = vrot.lane.b32.xlu0 %v418, 16
        %v453 = vpop.permute.xlu0 %452
        %454 = vrot.lane.b32.xlu0 %v419, 16
        %v455 = vpop.permute.xlu0 %454
        %456 = vrot.lane.b32.xlu0 %v420, 16
        %v457 = vpop.permute.xlu0 %456
        %458 = vrot.lane.b32.xlu0 %v421, 16
        %v459 = vpop.permute.xlu0 %458
        %460 = vrot.lane.b32.xlu0 %v422, 16
        %v461 = vpop.permute.xlu0 %460
        %462 = vrot.lane.b32.xlu0 %v423, 16
        %v463 = vpop.permute.xlu0 %462
        %464 = vrot.lane.b32.xlu0 %v424, 16
        %v465 = vpop.permute.xlu0 %464
        %466 = vrot.lane.b32.xlu0 %v425, 16
        %v467 = vpop.permute.xlu0 %466
        %468 = vrot.lane.b32.xlu0 %v426, 16
        %v469 = vpop.permute.xlu0 %468
        %470 = vrot.lane.b32.xlu0 %v427, 16
        %v471 = vpop.permute.xlu0 %470
        %472 = vrot.lane.b32.xlu0 %v428, 16
        %v473 = vpop.permute.xlu0 %472
        %474 = vrot.lane.b32.xlu0 %v429, 16
        %v475 = vpop.permute.xlu0 %474
        %476 = vrot.lane.b32.xlu0 %v430, 16
        %v477 = vpop.permute.xlu0 %476
        %478 = vrot.lane.b32.xlu0 %v431, 16
        %v479 = vpop.permute.xlu0 %478
        %vm496 = vcmask 523392
        %497 = vst.msk [vmem:[#allocation2] sm:$0xff] %vm496, %v449
        %498 = vst.msk [vmem:[#allocation2 + $0x8] sm:$0xff] %vm496, %v451
        %499 = vst.msk [vmem:[#allocation2 + $0x10] sm:$0xff] %vm496, %v453
        %500 = vst.msk [vmem:[#allocation2 + $0x18] sm:$0xff] %vm496, %v455
        %501 = vst.msk [vmem:[#allocation2 + $0x20] sm:$0xff] %vm496, %v457
        %502 = vst.msk [vmem:[#allocation2 + $0x28] sm:$0xff] %vm496, %v459
        %503 = vst.msk [vmem:[#allocation2 + $0x30] sm:$0xff] %vm496, %v461
        %504 = vst.msk [vmem:[#allocation2 + $0x38] sm:$0xff] %vm496, %v463
        %505 = vst.msk [vmem:[#allocation2 + $0x40] sm:$0xff] %vm496, %v465
        %506 = vst.msk [vmem:[#allocation2 + $0x48] sm:$0xff] %vm496, %v467
        %507 = vst.msk [vmem:[#allocation2 + $0x50] sm:$0xff] %vm496, %v469
        %508 = vst.msk [vmem:[#allocation2 + $0x58] sm:$0xff] %vm496, %v471
        %509 = vst.msk [vmem:[#allocation2 + $0x60] sm:$0xff] %vm496, %v473
        %510 = vst.msk [vmem:[#allocation2 + $0x68] sm:$0xff] %vm496, %v475
        %511 = vst.msk [vmem:[#allocation2 + $0x70] sm:$0xff] %vm496, %v477
        %512 = vst.msk [vmem:[#allocation2 + $0x78] sm:$0xff] %vm496, %v479
        %v513 = vld [vmem:[#allocation2] sm:$0xff]
        %v514 = vld [vmem:[#allocation2 + $0x8] sm:$0xff]
        %v515 = vld [vmem:[#allocation2 + $0x10] sm:$0xff]
        %v516 = vld [vmem:[#allocation2 + $0x18] sm:$0xff]
        %v517 = vld [vmem:[#allocation2 + $0x20] sm:$0xff]
        %v518 = vld [vmem:[#allocation2 + $0x28] sm:$0xff]
        %v519 = vld [vmem:[#allocation2 + $0x30] sm:$0xff]
        %v520 = vld [vmem:[#allocation2 + $0x38] sm:$0xff]
        %v521 = vld [vmem:[#allocation2 + $0x40] sm:$0xff]
        %v522 = vld [vmem:[#allocation2 + $0x48] sm:$0xff]
        %v523 = vld [vmem:[#allocation2 + $0x50] sm:$0xff]
        %v524 = vld [vmem:[#allocation2 + $0x58] sm:$0xff]
        %v525 = vld [vmem:[#allocation2 + $0x60] sm:$0xff]
        %v526 = vld [vmem:[#allocation2 + $0x68] sm:$0xff]
        %v527 = vld [vmem:[#allocation2 + $0x70] sm:$0xff]
        %v528 = vld [vmem:[#allocation2 + $0x78] sm:$0xff]
        %v529 = vpack.c.bf16 %v514, %v513
        %v530 = vpack.c.bf16 %v516, %v515
        %v531 = vpack.c.bf16 %v518, %v517
        %v532 = vpack.c.bf16 %v520, %v519
        %v533 = vpack.c.bf16 %v522, %v521
        %v534 = vpack.c.bf16 %v524, %v523
        %v535 = vpack.c.bf16 %v526, %v525
        %v536 = vpack.c.bf16 %v528, %v527
        %v537 = vld [vmem:[%s2] sm:$0xf]
        %v538 = vld [vmem:[%s2 + $0x4] sm:$0xf]
        %v539 = vld [vmem:[%s2 + $0x8] sm:$0xf]
        %v540 = vld [vmem:[%s2 + $0xc] sm:$0xf]
        %v541 = vld [vmem:[%s2 + $0x10] sm:$0xf]
        %v542 = vld [vmem:[%s2 + $0x14] sm:$0xf]
        %v543 = vld [vmem:[%s2 + $0x18] sm:$0xf]
        %v544 = vld [vmem:[%s2 + $0x1c] sm:$0xf]
        %v545 = vld [vmem:[%s3] sm:$0x1]
        %v547 = vlaneseq
        %v548 = vshrl.u32 %v547, 7
        %v549 = vsub.s32 0, %v548
        %v550 = vrot.slane %v545, %v549
        %v560 = vunpack.c.l.b16 %v537
        %v561 = vunpack.c.l.b16 %v538
        %v562 = vunpack.c.l.b16 %v539
        %v563 = vunpack.c.l.b16 %v540
        %v564 = vunpack.c.l.b16 %v541
        %v565 = vunpack.c.l.b16 %v542
        %v566 = vunpack.c.l.b16 %v543
        %v567 = vunpack.c.l.b16 %v544
        %v568 = vpack.c.b16 %v561, %v560
        %v569 = vpack.c.b16 %v563, %v562
        %v570 = vpack.c.b16 %v565, %v564
        %v571 = vpack.c.b16 %v567, %v566
        %vm576 = vcmask 523264
        %v578 = vsel %vm576, %v529, 0
        %v581 = vsel %vm576, %v530, 0
        %v584 = vsel %vm576, %v531, 0
        %v587 = vsel %vm576, %v532, 0
        %v590 = vsel %vm576, %v533, 0
        %v593 = vsel %vm576, %v534, 0
        %v596 = vsel %vm576, %v535, 0
        %v599 = vsel %vm576, %v536, 0
        %601 = vmatprep.subr.bf16.mxu0 0
        %602 = vmatpush1.bf16.msra.mxu0 0
        %603 = vmatprep.subr.bf16.mxu0 0
        %604 = vmatpush1.bf16.msra.mxu0 0
        %605 = vmatprep.subr.bf16.mxu0 0
        %606 = vmatpush1.bf16.msra.mxu0 0
        %607 = vmatprep.subr.bf16.mxu0 0
        %608 = vmatpush1.bf16.msra.mxu0 0
        %609 = vmatprep.subr.bf16.mxu0 0
        %610 = vmatpush1.bf16.msra.mxu0 %v571
        %611 = vmatprep.subr.bf16.mxu0 0
        %612 = vmatpush1.bf16.msra.mxu0 %v570
        %613 = vmatprep.subr.bf16.mxu0 0
        %614 = vmatpush1.bf16.msra.mxu0 %v569
        %615 = vmatprep.subr.bf16.mxu0 0
        %616 = vmatpush1.bf16.msra.mxu0 %v568
        %617 = vmatprep.subr.bf16.mxu0 0
        %618 = vmatpush2.bf16.msra.mxu0 0
        %619 = vmatprep.subr.bf16.mxu0 0
        %620 = vmatpush2.bf16.msra.mxu0 0
        %621 = vmatprep.subr.bf16.mxu0 0
        %622 = vmatpush2.bf16.msra.mxu0 0
        %623 = vmatprep.subr.bf16.mxu0 0
        %624 = vmatpush2.bf16.msra.mxu0 0
        %625 = vmatprep.subr.bf16.mxu0 0
        %626 = vmatpush2.bf16.msra.mxu0 0
        %627 = vmatprep.subr.bf16.mxu0 0
        %628 = vmatpush2.bf16.msra.mxu0 0
        %629 = vmatprep.subr.bf16.mxu0 0
        %630 = vmatpush2.bf16.msra.mxu0 0
        %631 = vmatprep.subr.bf16.mxu0 0
        %632 = vmatpush2.bf16.msra.mxu0 0
        %633 = vmatprep.mubr.bf16.mxu0 0
        %634 = vmatmul.mubr.bf16.gmra.mxu0 %v578
        %v635 = vpop.f32.mrf.mxu0
        %v636 = vadd.f32 %v550, %v635
        %v637 = vpop.f32.mrf.mxu0
        %v638 = vpop.f32.mrf.mxu0
        %v639 = vadd.f32 %v550, %v638
        %v640 = vpop.f32.mrf.mxu0
        %641 = vmatprep.mubr.bf16.mxu0 0
        %642 = vmatmul.mubr.bf16.gmra.mxu0 %v581
        %v643 = vpop.f32.mrf.mxu0
        %v644 = vadd.f32 %v550, %v643
        %v645 = vpop.f32.mrf.mxu0
        %v646 = vpop.f32.mrf.mxu0
        %v647 = vadd.f32 %v550, %v646
        %v648 = vpop.f32.mrf.mxu0
        %649 = vmatprep.mubr.bf16.mxu0 0
        %650 = vmatmul.mubr.bf16.gmra.mxu0 %v584
        %v651 = vpop.f32.mrf.mxu0
        %v652 = vadd.f32 %v550, %v651
        %v653 = vpop.f32.mrf.mxu0
        %v654 = vpop.f32.mrf.mxu0
        %v655 = vadd.f32 %v550, %v654
        %v656 = vpop.f32.mrf.mxu0
        %657 = vmatprep.mubr.bf16.mxu0 0
        %658 = vmatmul.mubr.bf16.gmra.mxu0 %v587
        %v659 = vpop.f32.mrf.mxu0
        %v660 = vadd.f32 %v550, %v659
        %v661 = vpop.f32.mrf.mxu0
        %v662 = vpop.f32.mrf.mxu0
        %v663 = vadd.f32 %v550, %v662
        %v664 = vpop.f32.mrf.mxu0
        %665 = vmatprep.mubr.bf16.mxu0 0
        %666 = vmatmul.mubr.bf16.gmra.mxu0 %v590
        %v667 = vpop.f32.mrf.mxu0
        %v668 = vadd.f32 %v550, %v667
        %v669 = vpop.f32.mrf.mxu0
        %v670 = vpop.f32.mrf.mxu0
        %v671 = vadd.f32 %v550, %v670
        %v672 = vpop.f32.mrf.mxu0
        %673 = vmatprep.mubr.bf16.mxu0 0
        %674 = vmatmul.mubr.bf16.gmra.mxu0 %v593
        %v675 = vpop.f32.mrf.mxu0
        %v676 = vadd.f32 %v550, %v675
        %v677 = vpop.f32.mrf.mxu0
        %v678 = vpop.f32.mrf.mxu0
        %v679 = vadd.f32 %v550, %v678
        %v680 = vpop.f32.mrf.mxu0
        %681 = vmatprep.mubr.bf16.mxu0 0
        %682 = vmatmul.mubr.bf16.gmra.mxu0 %v596
        %v683 = vpop.f32.mrf.mxu0
        %v684 = vadd.f32 %v550, %v683
        %v685 = vpop.f32.mrf.mxu0
        %v686 = vpop.f32.mrf.mxu0
        %v687 = vadd.f32 %v550, %v686
        %v688 = vpop.f32.mrf.mxu0
        %689 = vmatprep.mubr.bf16.mxu0 0
        %690 = vmatmul.mubr.bf16.gmra.mxu0 %v599
        %v691 = vpop.f32.mrf.mxu0
        %v692 = vadd.f32 %v550, %v691
        %v693 = vpop.f32.mrf.mxu0
        %v694 = vpop.f32.mrf.mxu0
        %v695 = vadd.f32 %v550, %v694
        %v696 = vpop.f32.mrf.mxu0
        %697 = vdwg.mxu0
        %vm698 = vcmp.gt.f32.partialorder %v636, 0.0
        %vm699 = vcmp.gt.f32.partialorder %v639, 0.0
        %vm700 = vcmp.gt.f32.partialorder %v644, 0.0
        %vm701 = vcmp.gt.f32.partialorder %v647, 0.0
        %vm702 = vcmp.gt.f32.partialorder %v652, 0.0
        %vm703 = vcmp.gt.f32.partialorder %v655, 0.0
        %vm704 = vcmp.gt.f32.partialorder %v660, 0.0
        %vm705 = vcmp.gt.f32.partialorder %v663, 0.0
        %vm706 = vcmp.gt.f32.partialorder %v668, 0.0
        %vm707 = vcmp.gt.f32.partialorder %v671, 0.0
        %vm708 = vcmp.gt.f32.partialorder %v676, 0.0
        %vm709 = vcmp.gt.f32.partialorder %v679, 0.0
        %vm710 = vcmp.gt.f32.partialorder %v684, 0.0
        %vm711 = vcmp.gt.f32.partialorder %v687, 0.0
        %vm712 = vcmp.gt.f32.partialorder %v692, 0.0
        %vm713 = vcmp.gt.f32.partialorder %v695, 0.0
        %v714 = vmin.f32 %v636, 0.0
        %v715 = vmin.f32 %v639, 0.0
        %v716 = vmin.f32 %v644, 0.0
        %v717 = vmin.f32 %v647, 0.0
        %v718 = vmin.f32 %v652, 0.0
        %v719 = vmin.f32 %v655, 0.0
        %v720 = vmin.f32 %v660, 0.0
        %v721 = vmin.f32 %v663, 0.0
        %v722 = vmin.f32 %v668, 0.0
        %v723 = vmin.f32 %v671, 0.0
        %v724 = vmin.f32 %v676, 0.0
        %v725 = vmin.f32 %v679, 0.0
        %v726 = vmin.f32 %v684, 0.0
        %v727 = vmin.f32 %v687, 0.0
        %v728 = vmin.f32 %v692, 0.0
        %v729 = vmin.f32 %v695, 0.0
        %v730 = vmul.f32 %v714, 1.442695
        %v731 = vpow.pop %v730
        %v732 = vmul.f32 %v715, 1.442695
        %v733 = vpow.pop %v732
        %v734 = vmul.f32 %v716, 1.442695
        %v735 = vpow.pop %v734
        %v736 = vmul.f32 %v717, 1.442695
        %v737 = vpow.pop %v736
        %v738 = vmul.f32 %v718, 1.442695
        %v739 = vpow.pop %v738
        %v740 = vmul.f32 %v719, 1.442695
        %v741 = vpow.pop %v740
        %v742 = vmul.f32 %v720, 1.442695
        %v743 = vpow.pop %v742
        %v744 = vmul.f32 %v721, 1.442695
        %v745 = vpow.pop %v744
        %v746 = vmul.f32 %v722, 1.442695
        %v747 = vpow.pop %v746
        %v748 = vmul.f32 %v723, 1.442695
        %v749 = vpow.pop %v748
        %v750 = vmul.f32 %v724, 1.442695
        %v751 = vpow.pop %v750
        %v752 = vmul.f32 %v725, 1.442695
        %v753 = vpow.pop %v752
        %v754 = vmul.f32 %v726, 1.442695
        %v755 = vpow.pop %v754
        %v756 = vmul.f32 %v727, 1.442695
        %v757 = vpow.pop %v756
        %v758 = vmul.f32 %v728, 1.442695
        %v759 = vpow.pop %v758
        %v760 = vmul.f32 %v729, 1.442695
        %v761 = vpow.pop %v760
        %v762 = vsub.f32 %v731, 1.0
        %v763 = vsub.f32 %v733, 1.0
        %v764 = vsub.f32 %v735, 1.0
        %v765 = vsub.f32 %v737, 1.0
        %v766 = vsub.f32 %v739, 1.0
        %v767 = vsub.f32 %v741, 1.0
        %v768 = vsub.f32 %v743, 1.0
        %v769 = vsub.f32 %v745, 1.0
        %v770 = vsub.f32 %v747, 1.0
        %v771 = vsub.f32 %v749, 1.0
        %v772 = vsub.f32 %v751, 1.0
        %v773 = vsub.f32 %v753, 1.0
        %v774 = vsub.f32 %v755, 1.0
        %v775 = vsub.f32 %v757, 1.0
        %v776 = vsub.f32 %v759, 1.0
        %v777 = vsub.f32 %v761, 1.0
        %v778 = vsel %vm698, %v636, %v762
        %v779 = vsel %vm699, %v639, %v763
        %v780 = vsel %vm700, %v644, %v764
        %v781 = vsel %vm701, %v647, %v765
        %v782 = vsel %vm702, %v652, %v766
        %v783 = vsel %vm703, %v655, %v767
        %v784 = vsel %vm704, %v660, %v768
        %v785 = vsel %vm705, %v663, %v769
        %v786 = vsel %vm706, %v668, %v770
        %v787 = vsel %vm707, %v671, %v771
        %v788 = vsel %vm708, %v676, %v772
        %v789 = vsel %vm709, %v679, %v773
        %v790 = vsel %vm710, %v684, %v774
        %v791 = vsel %vm711, %v687, %v775
        %v792 = vsel %vm712, %v692, %v776
        %v793 = vsel %vm713, %v695, %v777
        %v794 = vpack.c.bf16 %v779, %v778
        %v795 = vpack.c.bf16 %v781, %v780
        %v796 = vpack.c.bf16 %v783, %v782
        %v797 = vpack.c.bf16 %v785, %v784
        %v798 = vpack.c.bf16 %v787, %v786
        %v799 = vpack.c.bf16 %v789, %v788
        %v800 = vpack.c.bf16 %v791, %v790
        %v801 = vpack.c.bf16 %v793, %v792
        %v802 = vld [vmem:[%s4] sm:$0xf]
        %v803 = vld [vmem:[%s4 + $0x4] sm:$0xf]
        %v804 = vld [vmem:[%s4 + $0x8] sm:$0xf]
        %v805 = vld [vmem:[%s4 + $0xc] sm:$0xf]
        %v806 = vld [vmem:[%s4 + $0x10] sm:$0xf]
        %v807 = vld [vmem:[%s4 + $0x14] sm:$0xf]
        %v808 = vld [vmem:[%s4 + $0x18] sm:$0xf]
        %v809 = vld [vmem:[%s4 + $0x1c] sm:$0xf]
        %v810 = vld [vmem:[%s4 + $0x20] sm:$0xf]
        %v811 = vld [vmem:[%s4 + $0x24] sm:$0xf]
        %v812 = vld [vmem:[%s4 + $0x28] sm:$0xf]
        %v813 = vld [vmem:[%s4 + $0x2c] sm:$0xf]
        %v814 = vld [vmem:[%s4 + $0x30] sm:$0xf]
        %v815 = vld [vmem:[%s4 + $0x34] sm:$0xf]
        %v816 = vld [vmem:[%s4 + $0x38] sm:$0xf]
        %v817 = vld [vmem:[%s4 + $0x3c] sm:$0xf]
        %v818 = vld [vmem:[%s5] sm:$0x1]
        %v820 = vlaneseq
        %v821 = vshrl.u32 %v820, 7
        %v822 = vsub.s32 0, %v821
        %v823 = vrot.slane %v818, %v822
        %v841 = vunpack.c.l.b16 %v802
        %v842 = vunpack.c.l.b16 %v803
        %v843 = vunpack.c.l.b16 %v804
        %v844 = vunpack.c.l.b16 %v805
        %v845 = vunpack.c.l.b16 %v806
        %v846 = vunpack.c.l.b16 %v807
        %v847 = vunpack.c.l.b16 %v808
        %v848 = vunpack.c.l.b16 %v809
        %v849 = vunpack.c.l.b16 %v810
        %v850 = vunpack.c.l.b16 %v811
        %v851 = vunpack.c.l.b16 %v812
        %v852 = vunpack.c.l.b16 %v813
        %v853 = vunpack.c.l.b16 %v814
        %v854 = vunpack.c.l.b16 %v815
        %v855 = vunpack.c.l.b16 %v816
        %v856 = vunpack.c.l.b16 %v817
        %v857 = vpack.c.b16 %v842, %v841
        %v858 = vpack.c.b16 %v844, %v843
        %v859 = vpack.c.b16 %v846, %v845
        %v860 = vpack.c.b16 %v848, %v847
        %v861 = vpack.c.b16 %v850, %v849
        %v862 = vpack.c.b16 %v852, %v851
        %v863 = vpack.c.b16 %v854, %v853
        %v864 = vpack.c.b16 %v856, %v855
        %873 = vmatprep.subr.bf16.mxu0 0
        %874 = vmatpush1.bf16.msra.mxu0 %v864
        %875 = vmatprep.subr.bf16.mxu0 0
        %876 = vmatpush1.bf16.msra.mxu0 %v863
        %877 = vmatprep.subr.bf16.mxu0 0
        %878 = vmatpush1.bf16.msra.mxu0 %v862
        %879 = vmatprep.subr.bf16.mxu0 0
        %880 = vmatpush1.bf16.msra.mxu0 %v861
        %881 = vmatprep.subr.bf16.mxu0 0
        %882 = vmatpush1.bf16.msra.mxu0 %v860
        %883 = vmatprep.subr.bf16.mxu0 0
        %884 = vmatpush1.bf16.msra.mxu0 %v859
        %885 = vmatprep.subr.bf16.mxu0 0
        %886 = vmatpush1.bf16.msra.mxu0 %v858
        %887 = vmatprep.subr.bf16.mxu0 0
        %888 = vmatpush1.bf16.msra.mxu0 %v857
        %889 = vmatprep.subr.bf16.mxu0 0
        %890 = vmatpush2.bf16.msra.mxu0 0
        %891 = vmatprep.subr.bf16.mxu0 0
        %892 = vmatpush2.bf16.msra.mxu0 0
        %893 = vmatprep.subr.bf16.mxu0 0
        %894 = vmatpush2.bf16.msra.mxu0 0
        %895 = vmatprep.subr.bf16.mxu0 0
        %896 = vmatpush2.bf16.msra.mxu0 0
        %897 = vmatprep.subr.bf16.mxu0 0
        %898 = vmatpush2.bf16.msra.mxu0 0
        %899 = vmatprep.subr.bf16.mxu0 0
        %900 = vmatpush2.bf16.msra.mxu0 0
        %901 = vmatprep.subr.bf16.mxu0 0
        %902 = vmatpush2.bf16.msra.mxu0 0
        %903 = vmatprep.subr.bf16.mxu0 0
        %904 = vmatpush2.bf16.msra.mxu0 0
        %905 = vmatprep.mubr.bf16.mxu0 0
        %906 = vmatmul.mubr.bf16.gmra.mxu0 %v794
        %v907 = vpop.f32.mrf.mxu0
        %v908 = vadd.f32 %v823, %v907
        %v909 = vpop.f32.mrf.mxu0
        %v910 = vpop.f32.mrf.mxu0
        %v911 = vadd.f32 %v823, %v910
        %v912 = vpop.f32.mrf.mxu0
        %913 = vmatprep.mubr.bf16.mxu0 0
        %914 = vmatmul.mubr.bf16.gmra.mxu0 %v795
        %v915 = vpop.f32.mrf.mxu0
        %v916 = vadd.f32 %v823, %v915
        %v917 = vpop.f32.mrf.mxu0
        %v918 = vpop.f32.mrf.mxu0
        %v919 = vadd.f32 %v823, %v918
        %v920 = vpop.f32.mrf.mxu0
        %921 = vmatprep.mubr.bf16.mxu0 0
        %922 = vmatmul.mubr.bf16.gmra.mxu0 %v796
        %v923 = vpop.f32.mrf.mxu0
        %v924 = vadd.f32 %v823, %v923
        %v925 = vpop.f32.mrf.mxu0
        %v926 = vpop.f32.mrf.mxu0
        %v927 = vadd.f32 %v823, %v926
        %v928 = vpop.f32.mrf.mxu0
        %929 = vmatprep.mubr.bf16.mxu0 0
        %930 = vmatmul.mubr.bf16.gmra.mxu0 %v797
        %v931 = vpop.f32.mrf.mxu0
        %v932 = vadd.f32 %v823, %v931
        %v933 = vpop.f32.mrf.mxu0
        %v934 = vpop.f32.mrf.mxu0
        %v935 = vadd.f32 %v823, %v934
        %v936 = vpop.f32.mrf.mxu0
        %937 = vmatprep.mubr.bf16.mxu0 0
        %938 = vmatmul.mubr.bf16.gmra.mxu0 %v798
        %v939 = vpop.f32.mrf.mxu0
        %v940 = vadd.f32 %v823, %v939
        %v941 = vpop.f32.mrf.mxu0
        %v942 = vpop.f32.mrf.mxu0
        %v943 = vadd.f32 %v823, %v942
        %v944 = vpop.f32.mrf.mxu0
        %945 = vmatprep.mubr.bf16.mxu0 0
        %946 = vmatmul.mubr.bf16.gmra.mxu0 %v799
        %v947 = vpop.f32.mrf.mxu0
        %v948 = vadd.f32 %v823, %v947
        %v949 = vpop.f32.mrf.mxu0
        %v950 = vpop.f32.mrf.mxu0
        %v951 = vadd.f32 %v823, %v950
        %v952 = vpop.f32.mrf.mxu0
        %953 = vmatprep.mubr.bf16.mxu0 0
        %954 = vmatmul.mubr.bf16.gmra.mxu0 %v800
        %v955 = vpop.f32.mrf.mxu0
        %v956 = vadd.f32 %v823, %v955
        %v957 = vpop.f32.mrf.mxu0
        %v958 = vpop.f32.mrf.mxu0
        %v959 = vadd.f32 %v823, %v958
        %v960 = vpop.f32.mrf.mxu0
        %961 = vmatprep.mubr.bf16.mxu0 0
        %962 = vmatmul.mubr.bf16.gmra.mxu0 %v801
        %v963 = vpop.f32.mrf.mxu0
        %v964 = vadd.f32 %v823, %v963
        %v965 = vpop.f32.mrf.mxu0
        %v966 = vpop.f32.mrf.mxu0
        %v967 = vadd.f32 %v823, %v966
        %v968 = vpop.f32.mrf.mxu0
        %969 = vdwg.mxu0
        %vm970 = vcmp.gt.f32.partialorder %v908, 0.0
        %vm971 = vcmp.gt.f32.partialorder %v911, 0.0
        %vm972 = vcmp.gt.f32.partialorder %v916, 0.0
        %vm973 = vcmp.gt.f32.partialorder %v919, 0.0
        %vm974 = vcmp.gt.f32.partialorder %v924, 0.0
        %vm975 = vcmp.gt.f32.partialorder %v927, 0.0
        %vm976 = vcmp.gt.f32.partialorder %v932, 0.0
        %vm977 = vcmp.gt.f32.partialorder %v935, 0.0
        %vm978 = vcmp.gt.f32.partialorder %v940, 0.0
        %vm979 = vcmp.gt.f32.partialorder %v943, 0.0
        %vm980 = vcmp.gt.f32.partialorder %v948, 0.0
        %vm981 = vcmp.gt.f32.partialorder %v951, 0.0
        %vm982 = vcmp.gt.f32.partialorder %v956, 0.0
        %vm983 = vcmp.gt.f32.partialorder %v959, 0.0
        %vm984 = vcmp.gt.f32.partialorder %v964, 0.0
        %vm985 = vcmp.gt.f32.partialorder %v967, 0.0
        %v986 = vmin.f32 %v908, 0.0
        %v987 = vmin.f32 %v911, 0.0
        %v988 = vmin.f32 %v916, 0.0
        %v989 = vmin.f32 %v919, 0.0
        %v990 = vmin.f32 %v924, 0.0
        %v991 = vmin.f32 %v927, 0.0
        %v992 = vmin.f32 %v932, 0.0
        %v993 = vmin.f32 %v935, 0.0
        %v994 = vmin.f32 %v940, 0.0
        %v995 = vmin.f32 %v943, 0.0
        %v996 = vmin.f32 %v948, 0.0
        %v997 = vmin.f32 %v951, 0.0
        %v998 = vmin.f32 %v956, 0.0
        %v999 = vmin.f32 %v959, 0.0
        %v1000 = vmin.f32 %v964, 0.0
        %v1001 = vmin.f32 %v967, 0.0
        %v1002 = vmul.f32 %v986, 1.442695
        %v1003 = vpow.pop %v1002
        %v1004 = vmul.f32 %v987, 1.442695
        %v1005 = vpow.pop %v1004
        %v1006 = vmul.f32 %v988, 1.442695
        %v1007 = vpow.pop %v1006
        %v1008 = vmul.f32 %v989, 1.442695
        %v1009 = vpow.pop %v1008
        %v1010 = vmul.f32 %v990, 1.442695
        %v1011 = vpow.pop %v1010
        %v1012 = vmul.f32 %v991, 1.442695
        %v1013 = vpow.pop %v1012
        %v1014 = vmul.f32 %v992, 1.442695
        %v1015 = vpow.pop %v1014
        %v1016 = vmul.f32 %v993, 1.442695
        %v1017 = vpow.pop %v1016
        %v1018 = vmul.f32 %v994, 1.442695
        %v1019 = vpow.pop %v1018
        %v1020 = vmul.f32 %v995, 1.442695
        %v1021 = vpow.pop %v1020
        %v1022 = vmul.f32 %v996, 1.442695
        %v1023 = vpow.pop %v1022
        %v1024 = vmul.f32 %v997, 1.442695
        %v1025 = vpow.pop %v1024
        %v1026 = vmul.f32 %v998, 1.442695
        %v1027 = vpow.pop %v1026
        %v1028 = vmul.f32 %v999, 1.442695
        %v1029 = vpow.pop %v1028
        %v1030 = vmul.f32 %v1000, 1.442695
        %v1031 = vpow.pop %v1030
        %v1032 = vmul.f32 %v1001, 1.442695
        %v1033 = vpow.pop %v1032
        %v1034 = vsub.f32 %v1003, 1.0
        %v1035 = vsub.f32 %v1005, 1.0
        %v1036 = vsub.f32 %v1007, 1.0
        %v1037 = vsub.f32 %v1009, 1.0
        %v1038 = vsub.f32 %v1011, 1.0
        %v1039 = vsub.f32 %v1013, 1.0
        %v1040 = vsub.f32 %v1015, 1.0
        %v1041 = vsub.f32 %v1017, 1.0
        %v1042 = vsub.f32 %v1019, 1.0
        %v1043 = vsub.f32 %v1021, 1.0
        %v1044 = vsub.f32 %v1023, 1.0
        %v1045 = vsub.f32 %v1025, 1.0
        %v1046 = vsub.f32 %v1027, 1.0
        %v1047 = vsub.f32 %v1029, 1.0
        %v1048 = vsub.f32 %v1031, 1.0
        %v1049 = vsub.f32 %v1033, 1.0
        %v1050 = vsel %vm970, %v908, %v1034
        %v1051 = vsel %vm971, %v911, %v1035
        %v1052 = vsel %vm972, %v916, %v1036
        %v1053 = vsel %vm973, %v919, %v1037
        %v1054 = vsel %vm974, %v924, %v1038
        %v1055 = vsel %vm975, %v927, %v1039
        %v1056 = vsel %vm976, %v932, %v1040
        %v1057 = vsel %vm977, %v935, %v1041
        %v1058 = vsel %vm978, %v940, %v1042
        %v1059 = vsel %vm979, %v943, %v1043
        %v1060 = vsel %vm980, %v948, %v1044
        %v1061 = vsel %vm981, %v951, %v1045
        %v1062 = vsel %vm982, %v956, %v1046
        %v1063 = vsel %vm983, %v959, %v1047
        %v1064 = vsel %vm984, %v964, %v1048
        %v1065 = vsel %vm985, %v967, %v1049
        %v1066 = vpack.c.bf16 %v1051, %v1050
        %v1067 = vpack.c.bf16 %v1053, %v1052
        %v1068 = vpack.c.bf16 %v1055, %v1054
        %v1069 = vpack.c.bf16 %v1057, %v1056
        %v1070 = vpack.c.bf16 %v1059, %v1058
        %v1071 = vpack.c.bf16 %v1061, %v1060
        %v1072 = vpack.c.bf16 %v1063, %v1062
        %v1073 = vpack.c.bf16 %v1065, %v1064
        %v1074 = vld [vmem:[%s6] sm:$0xf]
        %v1075 = vld [vmem:[%s6 + $0x4] sm:$0xf]
        %v1076 = vld [vmem:[%s6 + $0x8] sm:$0xf]
        %v1077 = vld [vmem:[%s6 + $0xc] sm:$0xf]
        %v1078 = vld [vmem:[%s6 + $0x10] sm:$0xf]
        %v1079 = vld [vmem:[%s6 + $0x14] sm:$0xf]
        %v1080 = vld [vmem:[%s6 + $0x18] sm:$0xf]
        %v1081 = vld [vmem:[%s6 + $0x1c] sm:$0xf]
        %v1082 = vld [vmem:[%s6 + $0x20] sm:$0xf]
        %v1083 = vld [vmem:[%s6 + $0x24] sm:$0xf]
        %v1084 = vld [vmem:[%s6 + $0x28] sm:$0xf]
        %v1085 = vld [vmem:[%s6 + $0x2c] sm:$0xf]
        %v1086 = vld [vmem:[%s6 + $0x30] sm:$0xf]
        %v1087 = vld [vmem:[%s6 + $0x34] sm:$0xf]
        %v1088 = vld [vmem:[%s6 + $0x38] sm:$0xf]
        %v1089 = vld [vmem:[%s6 + $0x3c] sm:$0xf]
        %v1090 = vld [vmem:[%s7] sm:$0x1]
        %v1092 = vlaneseq
        %v1093 = vshrl.u32 %v1092, 7
        %v1094 = vsub.s32 0, %v1093
        %v1095 = vrot.slane %v1090, %v1094
        %v1113 = vunpack.c.l.b16 %v1074
        %v1114 = vunpack.c.l.b16 %v1075
        %v1115 = vunpack.c.l.b16 %v1076
        %v1116 = vunpack.c.l.b16 %v1077
        %v1117 = vunpack.c.l.b16 %v1078
        %v1118 = vunpack.c.l.b16 %v1079
        %v1119 = vunpack.c.l.b16 %v1080
        %v1120 = vunpack.c.l.b16 %v1081
        %v1121 = vunpack.c.l.b16 %v1082
        %v1122 = vunpack.c.l.b16 %v1083
        %v1123 = vunpack.c.l.b16 %v1084
        %v1124 = vunpack.c.l.b16 %v1085
        %v1125 = vunpack.c.l.b16 %v1086
        %v1126 = vunpack.c.l.b16 %v1087
        %v1127 = vunpack.c.l.b16 %v1088
        %v1128 = vunpack.c.l.b16 %v1089
        %v1129 = vpack.c.b16 %v1114, %v1113
        %v1130 = vpack.c.b16 %v1116, %v1115
        %v1131 = vpack.c.b16 %v1118, %v1117
        %v1132 = vpack.c.b16 %v1120, %v1119
        %v1133 = vpack.c.b16 %v1122, %v1121
        %v1134 = vpack.c.b16 %v1124, %v1123
        %v1135 = vpack.c.b16 %v1126, %v1125
        %v1136 = vpack.c.b16 %v1128, %v1127
        %1145 = vmatprep.subr.bf16.mxu0 0
        %1146 = vmatpush1.bf16.msra.mxu0 %v1136
        %1147 = vmatprep.subr.bf16.mxu0 0
        %1148 = vmatpush1.bf16.msra.mxu0 %v1135
        %1149 = vmatprep.subr.bf16.mxu0 0
        %1150 = vmatpush1.bf16.msra.mxu0 %v1134
        %1151 = vmatprep.subr.bf16.mxu0 0
        %1152 = vmatpush1.bf16.msra.mxu0 %v1133
        %1153 = vmatprep.subr.bf16.mxu0 0
        %1154 = vmatpush1.bf16.msra.mxu0 %v1132
        %1155 = vmatprep.subr.bf16.mxu0 0
        %1156 = vmatpush1.bf16.msra.mxu0 %v1131
        %1157 = vmatprep.subr.bf16.mxu0 0
        %1158 = vmatpush1.bf16.msra.mxu0 %v1130
        %1159 = vmatprep.subr.bf16.mxu0 0
        %1160 = vmatpush1.bf16.msra.mxu0 %v1129
        %1161 = vmatprep.subr.bf16.mxu0 0
        %1162 = vmatpush2.bf16.msra.mxu0 0
        %1163 = vmatprep.subr.bf16.mxu0 0
        %1164 = vmatpush2.bf16.msra.mxu0 0
        %1165 = vmatprep.subr.bf16.mxu0 0
        %1166 = vmatpush2.bf16.msra.mxu0 0
        %1167 = vmatprep.subr.bf16.mxu0 0
        %1168 = vmatpush2.bf16.msra.mxu0 0
        %1169 = vmatprep.subr.bf16.mxu0 0
        %1170 = vmatpush2.bf16.msra.mxu0 0
        %1171 = vmatprep.subr.bf16.mxu0 0
        %1172 = vmatpush2.bf16.msra.mxu0 0
        %1173 = vmatprep.subr.bf16.mxu0 0
        %1174 = vmatpush2.bf16.msra.mxu0 0
        %1175 = vmatprep.subr.bf16.mxu0 0
        %1176 = vmatpush2.bf16.msra.mxu0 0
        %1177 = vmatprep.mubr.bf16.mxu0 0
        %1178 = vmatmul.mubr.bf16.gmra.mxu0 %v1066
        %v1179 = vpop.f32.mrf.mxu0
        %v1180 = vadd.f32 %v1095, %v1179
        %v1181 = vpop.f32.mrf.mxu0
        %v1182 = vpop.f32.mrf.mxu0
        %v1183 = vadd.f32 %v1095, %v1182
        %v1184 = vpop.f32.mrf.mxu0
        %1185 = vmatprep.mubr.bf16.mxu0 0
        %1186 = vmatmul.mubr.bf16.gmra.mxu0 %v1067
        %v1187 = vpop.f32.mrf.mxu0
        %v1188 = vadd.f32 %v1095, %v1187
        %v1189 = vpop.f32.mrf.mxu0
        %v1190 = vpop.f32.mrf.mxu0
        %v1191 = vadd.f32 %v1095, %v1190
        %v1192 = vpop.f32.mrf.mxu0
        %1193 = vmatprep.mubr.bf16.mxu0 0
        %1194 = vmatmul.mubr.bf16.gmra.mxu0 %v1068
        %v1195 = vpop.f32.mrf.mxu0
        %v1196 = vadd.f32 %v1095, %v1195
        %v1197 = vpop.f32.mrf.mxu0
        %v1198 = vpop.f32.mrf.mxu0
        %v1199 = vadd.f32 %v1095, %v1198
        %v1200 = vpop.f32.mrf.mxu0
        %1201 = vmatprep.mubr.bf16.mxu0 0
        %1202 = vmatmul.mubr.bf16.gmra.mxu0 %v1069
        %v1203 = vpop.f32.mrf.mxu0
        %v1204 = vadd.f32 %v1095, %v1203
        %v1205 = vpop.f32.mrf.mxu0
        %v1206 = vpop.f32.mrf.mxu0
        %v1207 = vadd.f32 %v1095, %v1206
        %v1208 = vpop.f32.mrf.mxu0
        %1209 = vmatprep.mubr.bf16.mxu0 0
        %1210 = vmatmul.mubr.bf16.gmra.mxu0 %v1070
        %v1211 = vpop.f32.mrf.mxu0
        %v1212 = vadd.f32 %v1095, %v1211
        %v1213 = vpop.f32.mrf.mxu0
        %v1214 = vpop.f32.mrf.mxu0
        %v1215 = vadd.f32 %v1095, %v1214
        %v1216 = vpop.f32.mrf.mxu0
        %1217 = vmatprep.mubr.bf16.mxu0 0
        %1218 = vmatmul.mubr.bf16.gmra.mxu0 %v1071
        %v1219 = vpop.f32.mrf.mxu0
        %v1220 = vadd.f32 %v1095, %v1219
        %v1221 = vpop.f32.mrf.mxu0
        %v1222 = vpop.f32.mrf.mxu0
        %v1223 = vadd.f32 %v1095, %v1222
        %v1224 = vpop.f32.mrf.mxu0
        %1225 = vmatprep.mubr.bf16.mxu0 0
        %1226 = vmatmul.mubr.bf16.gmra.mxu0 %v1072
        %v1227 = vpop.f32.mrf.mxu0
        %v1228 = vadd.f32 %v1095, %v1227
        %v1229 = vpop.f32.mrf.mxu0
        %v1230 = vpop.f32.mrf.mxu0
        %v1231 = vadd.f32 %v1095, %v1230
        %v1232 = vpop.f32.mrf.mxu0
        %1233 = vmatprep.mubr.bf16.mxu0 0
        %1234 = vmatmul.mubr.bf16.gmra.mxu0 %v1073
        %v1235 = vpop.f32.mrf.mxu0
        %v1236 = vadd.f32 %v1095, %v1235
        %v1237 = vpop.f32.mrf.mxu0
        %v1238 = vpop.f32.mrf.mxu0
        %v1239 = vadd.f32 %v1095, %v1238
        %v1240 = vpop.f32.mrf.mxu0
        %1241 = vdwg.mxu0
        %vm1242 = vcmp.gt.f32.partialorder %v1180, 0.0
        %vm1243 = vcmp.gt.f32.partialorder %v1183, 0.0
        %vm1244 = vcmp.gt.f32.partialorder %v1188, 0.0
        %vm1245 = vcmp.gt.f32.partialorder %v1191, 0.0
        %vm1246 = vcmp.gt.f32.partialorder %v1196, 0.0
        %vm1247 = vcmp.gt.f32.partialorder %v1199, 0.0
        %vm1248 = vcmp.gt.f32.partialorder %v1204, 0.0
        %vm1249 = vcmp.gt.f32.partialorder %v1207, 0.0
        %vm1250 = vcmp.gt.f32.partialorder %v1212, 0.0
        %vm1251 = vcmp.gt.f32.partialorder %v1215, 0.0
        %vm1252 = vcmp.gt.f32.partialorder %v1220, 0.0
        %vm1253 = vcmp.gt.f32.partialorder %v1223, 0.0
        %vm1254 = vcmp.gt.f32.partialorder %v1228, 0.0
        %vm1255 = vcmp.gt.f32.partialorder %v1231, 0.0
        %vm1256 = vcmp.gt.f32.partialorder %v1236, 0.0
        %vm1257 = vcmp.gt.f32.partialorder %v1239, 0.0
        %v1258 = vmin.f32 %v1180, 0.0
        %v1259 = vmin.f32 %v1183, 0.0
        %v1260 = vmin.f32 %v1188, 0.0
        %v1261 = vmin.f32 %v1191, 0.0
        %v1262 = vmin.f32 %v1196, 0.0
        %v1263 = vmin.f32 %v1199, 0.0
        %v1264 = vmin.f32 %v1204, 0.0
        %v1265 = vmin.f32 %v1207, 0.0
        %v1266 = vmin.f32 %v1212, 0.0
        %v1267 = vmin.f32 %v1215, 0.0
        %v1268 = vmin.f32 %v1220, 0.0
        %v1269 = vmin.f32 %v1223, 0.0
        %v1270 = vmin.f32 %v1228, 0.0
        %v1271 = vmin.f32 %v1231, 0.0
        %v1272 = vmin.f32 %v1236, 0.0
        %v1273 = vmin.f32 %v1239, 0.0
        %v1274 = vmul.f32 %v1258, 1.442695
        %v1275 = vpow.pop %v1274
        %v1276 = vmul.f32 %v1259, 1.442695
        %v1277 = vpow.pop %v1276
        %v1278 = vmul.f32 %v1260, 1.442695
        %v1279 = vpow.pop %v1278
        %v1280 = vmul.f32 %v1261, 1.442695
        %v1281 = vpow.pop %v1280
        %v1282 = vmul.f32 %v1262, 1.442695
        %v1283 = vpow.pop %v1282
        %v1284 = vmul.f32 %v1263, 1.442695
        %v1285 = vpow.pop %v1284
        %v1286 = vmul.f32 %v1264, 1.442695
        %v1287 = vpow.pop %v1286
        %v1288 = vmul.f32 %v1265, 1.442695
        %v1289 = vpow.pop %v1288
        %v1290 = vmul.f32 %v1266, 1.442695
        %v1291 = vpow.pop %v1290
        %v1292 = vmul.f32 %v1267, 1.442695
        %v1293 = vpow.pop %v1292
        %v1294 = vmul.f32 %v1268, 1.442695
        %v1295 = vpow.pop %v1294
        %v1296 = vmul.f32 %v1269, 1.442695
        %v1297 = vpow.pop %v1296
        %v1298 = vmul.f32 %v1270, 1.442695
        %v1299 = vpow.pop %v1298
        %v1300 = vmul.f32 %v1271, 1.442695
        %v1301 = vpow.pop %v1300
        %v1302 = vmul.f32 %v1272, 1.442695
        %v1303 = vpow.pop %v1302
        %v1304 = vmul.f32 %v1273, 1.442695
        %v1305 = vpow.pop %v1304
        %v1306 = vsub.f32 %v1275, 1.0
        %v1307 = vsub.f32 %v1277, 1.0
        %v1308 = vsub.f32 %v1279, 1.0
        %v1309 = vsub.f32 %v1281, 1.0
        %v1310 = vsub.f32 %v1283, 1.0
        %v1311 = vsub.f32 %v1285, 1.0
        %v1312 = vsub.f32 %v1287, 1.0
        %v1313 = vsub.f32 %v1289, 1.0
        %v1314 = vsub.f32 %v1291, 1.0
        %v1315 = vsub.f32 %v1293, 1.0
        %v1316 = vsub.f32 %v1295, 1.0
        %v1317 = vsub.f32 %v1297, 1.0
        %v1318 = vsub.f32 %v1299, 1.0
        %v1319 = vsub.f32 %v1301, 1.0
        %v1320 = vsub.f32 %v1303, 1.0
        %v1321 = vsub.f32 %v1305, 1.0
        %v1322 = vsel %vm1242, %v1180, %v1306
        %v1323 = vsel %vm1243, %v1183, %v1307
        %v1324 = vsel %vm1244, %v1188, %v1308
        %v1325 = vsel %vm1245, %v1191, %v1309
        %v1326 = vsel %vm1246, %v1196, %v1310
        %v1327 = vsel %vm1247, %v1199, %v1311
        %v1328 = vsel %vm1248, %v1204, %v1312
        %v1329 = vsel %vm1249, %v1207, %v1313
        %v1330 = vsel %vm1250, %v1212, %v1314
        %v1331 = vsel %vm1251, %v1215, %v1315
        %v1332 = vsel %vm1252, %v1220, %v1316
        %v1333 = vsel %vm1253, %v1223, %v1317
        %v1334 = vsel %vm1254, %v1228, %v1318
        %v1335 = vsel %vm1255, %v1231, %v1319
        %v1336 = vsel %vm1256, %v1236, %v1320
        %v1337 = vsel %vm1257, %v1239, %v1321
        %v1338 = vld [vmem:[%s8] sm:$0x1]
        %s1339 = sld [smem:[#allocation3]]
        %v1340 = vstv %s1339
        %1341 = vmatprep.subr.mxu0 0.0
        %1342 = vmatpush1.xpose.msra.mxu0 %v1337
        %1343 = vmatprep.subr.mxu0 0.0
        %1344 = vmatpush1.xpose.msra.mxu0 %v1336
        %1345 = vmatprep.subr.mxu0 0.0
        %1346 = vmatpush1.xpose.msra.mxu0 %v1335
        %1347 = vmatprep.subr.mxu0 0.0
        %1348 = vmatpush1.xpose.msra.mxu0 %v1334
        %1349 = vmatprep.subr.mxu0 0.0
        %1350 = vmatpush1.xpose.msra.mxu0 %v1333
        %1351 = vmatprep.subr.mxu0 0.0
        %1352 = vmatpush1.xpose.msra.mxu0 %v1332
        %1353 = vmatprep.subr.mxu0 0.0
        %1354 = vmatpush1.xpose.msra.mxu0 %v1331
        %1355 = vmatprep.subr.mxu0 0.0
        %1356 = vmatpush1.xpose.msra.mxu0 %v1330
        %1357 = vmatprep.subr.mxu0 0.0
        %1358 = vmatpush1.xpose.msra.mxu0 %v1329
        %1359 = vmatprep.subr.mxu0 0.0
        %1360 = vmatpush1.xpose.msra.mxu0 %v1328
        %1361 = vmatprep.subr.mxu0 0.0
        %1362 = vmatpush1.xpose.msra.mxu0 %v1327
        %1363 = vmatprep.subr.mxu0 0.0
        %1364 = vmatpush1.xpose.msra.mxu0 %v1326
        %1365 = vmatprep.subr.mxu0 0.0
        %1366 = vmatpush1.xpose.msra.mxu0 %v1325
        %1367 = vmatprep.subr.mxu0 0.0
        %1368 = vmatpush1.xpose.msra.mxu0 %v1324
        %1369 = vmatprep.subr.mxu0 0.0
        %1370 = vmatpush1.xpose.msra.mxu0 %v1323
        %1371 = vmatprep.subr.mxu0 0.0
        %1372 = vmatpush1.xpose.msra.mxu0 %v1322
        %1373 = vmatprep.subr.mxu0 0.0
        %1374 = vmatpush2.xpose.msra.mxu0 0.0
        %1375 = vmatprep.subr.mxu0 0.0
        %1376 = vmatpush2.xpose.msra.mxu0 0.0
        %1377 = vmatprep.subr.mxu0 0.0
        %1378 = vmatpush2.xpose.msra.mxu0 0.0
        %1379 = vmatprep.subr.mxu0 0.0
        %1380 = vmatpush2.xpose.msra.mxu0 0.0
        %1381 = vmatprep.subr.mxu0 0.0
        %1382 = vmatpush2.xpose.msra.mxu0 0.0
        %1383 = vmatprep.subr.mxu0 0.0
        %1384 = vmatpush2.xpose.msra.mxu0 0.0
        %1385 = vmatprep.subr.mxu0 0.0
        %1386 = vmatpush2.xpose.msra.mxu0 0.0
        %1387 = vmatprep.subr.mxu0 0.0
        %1388 = vmatpush2.xpose.msra.mxu0 0.0
        %1389 = vmatprep.subr.mxu0 0.0
        %1390 = vmatpush2.xpose.msra.mxu0 0.0
        %1391 = vmatprep.subr.mxu0 0.0
        %1392 = vmatpush2.xpose.msra.mxu0 0.0
        %1393 = vmatprep.subr.mxu0 0.0
        %1394 = vmatpush2.xpose.msra.mxu0 0.0
        %1395 = vmatprep.subr.mxu0 0.0
        %1396 = vmatpush2.xpose.msra.mxu0 0.0
        %1397 = vmatprep.subr.mxu0 0.0
        %1398 = vmatpush2.xpose.msra.mxu0 0.0
        %1399 = vmatprep.subr.mxu0 0.0
        %1400 = vmatpush2.xpose.msra.mxu0 0.0
        %1401 = vmatprep.subr.mxu0 0.0
        %1402 = vmatpush2.xpose.msra.mxu0 0.0
        %1403 = vmatprep.subr.mxu0 0.0
        %1404 = vmatpush2.xpose.msra.mxu0 0.0
        %1405 = vmatprep.mubr.f32.mxu0 0.0
        %1406 = vmatmul.mubr.f32.gmra.mxu0 %v1338
        %v1407 = vpop.f32.mrf.mxu0
        %v1408 = vadd.f32 %v1340, %v1407
        %v1409 = vpop.f32.mrf.mxu0
        %1410 = vdwg.mxu0
        %1411 = vst [vmem:[%s369] sm:$0x1] %v1408
        %s1412 = sand.u32 %s253, 1
        %s1413 = scalar_lea.sflag [#allocation5], %s1412
        %s1414 = sand.u32 %s253, 1
        %s1415 = scalar_lea.vmem [#allocation4], %s1414
        // Predicated region
        $region61: #{tpu_custom_call.1} parent=59 // pred_check
          %p1416 = pneg %p263
        $region62: #{tpu_custom_call.1} parent=59 // pred_check_branch
          %1418 = sbr.rel (%p1416) target = $region64
        $region63: #{tpu_custom_call.1} parent=59 // pred_region
          %s1420 = ssub.s32 16, 16
          %1421 = vsyncadd %s1413, %s1420
          %s1422 = smul.addr %s25, 16
          %s1423 = scalar_lea.hbm %s10, %s1422
          %s1425 = sshll.u32 %s1415, 4
          %s1426 = int_to_ptr.vmem [resolvable:$true] %s1425
          %1428 = dma.vmem_to_hbm [thread:$0]  %s1426, 16, %s1423, %s1413
        $region64: #{tpu_custom_call.1} parent=59 // pred_fallthru
          _
      $region60: #{tpu_custom_call.1} parent=5 // pred_fallthru
        _
      %p1429 = scmp.le.s32.totalorder 2, %s20
      // Predicated region
      $region65: #{tpu_custom_call.1} parent=5 // pred_check
        %p1430 = pneg %p1429
      $region66: #{tpu_custom_call.1} parent=5 // pred_check_branch
        %1432 = sbr.rel (%p1430) target = $region68
      $region67: #{tpu_custom_call.1} parent=5 // pred_region
        %s1433 = ssub.s32 %s20, 2
        // Predicated region
        $region69: #{tpu_custom_call.1} parent=67 // pred_check
          %p1434 = pneg %p269
        $region70: #{tpu_custom_call.1} parent=67 // pred_check_branch
          %1436 = sbr.rel (%p1434) target = $region72
        $region71: #{tpu_custom_call.1} parent=67 // pred_region
          %s1437 = sand.u32 %s254, 1
          %s1438 = scalar_lea.sflag [#allocation5], %s1437
          %s1439 = sand.u32 %s254, 1
          %s1440 = scalar_lea.vmem [#allocation4], %s1439
          %1441 = dma.done %s1438, 16
        $region72: #{tpu_custom_call.1} parent=67 // pred_fallthru
          _
      $region68: #{tpu_custom_call.1} parent=5 // pred_fallthru
        _
    $region6: #{tpu_custom_call.1} parent=1 // loop_footer
      %s24 = sadd.s32 1, %s20
    $region7: #{tpu_custom_call.1} parent=1 // loop_footer_branch
      %19 = sbr.rel target = $region3
    $region8: #{tpu_custom_call.1} parent=1 // loop_exit
      _
    %1442 = vsyncpa [#allocation5], 1
    %s1443 = scalar_lea.sflag [#allocation5], 1
    %1444 = vsyncpa %s1443, 1

</llo_original>
